<compile_context>
chip_gen: v6e
topology: v6e:2x2x1
jax: 0.10.0
libtpu: 0.0.40
codegen_flags: <defaults>
</compile_context>

<pallas_src>
import jax
import jax.numpy as jnp
from jax.experimental import pallas as pl
from jax.experimental.pallas import tpu as pltpu

# ---- module constants (from DeepFT_framework_16.__init__) ----
N_HOSTS = 16
N_FEATS = 3 * N_HOSTS            # 48
N_WINDOW = 1
N_LATENT = N_FEATS               # 48
N_HIDDEN = 32
# TODO(synk): PROTO_DIM and K are undefined globals in the reference source;
# fixed deterministically here (self.prototype is unused in forward()).
PROTO_DIM = 8
K = 3

N_T = N_WINDOW * N_FEATS                          # 48
N_S = N_HOSTS * N_HOSTS                           # 256
N_IN = N_T + N_S                                  # 304
N_ENC = N_HOSTS * N_LATENT                        # 768


def _deepft_kernel(t_ref, s_ref,
                   w_et_ref, w_es_ref, b_enc_ref,
                   w_s1_ref, b_s1_ref, w_s2_ref, b_s2_ref,
                   w_p1_ref, b_p1_ref, w_p2_ref, b_p2_ref, w_p3_ref, b_p3_ref,
                   states_ref, protos_ref):
    # ---- encoder: Linear(304 -> 768); nn.LeakyReLU(True) == slope 1.0 == identity ----
    # concat(t, s) @ W_enc  ==  t @ W_enc[:48] + s @ W_enc[48:]
    h = (jnp.dot(t_ref[...], w_et_ref[...], preferred_element_type=jnp.float32)
         + jnp.dot(s_ref[...], w_es_ref[...], preferred_element_type=jnp.float32)
         + b_enc_ref[...])                                            # (1, 768) f32
    h_bf = h.astype(jnp.bfloat16)

    # ---- state decoder: Linear(768->32) + [identity LReLU] + Linear(32->48) + Sigmoid ----
    s1 = (jnp.dot(h_bf, w_s1_ref[...], preferred_element_type=jnp.float32)
          + b_s1_ref[...])                                            # (1, 32)
    s2 = (jnp.dot(s1.astype(jnp.bfloat16), w_s2_ref[...],
                  preferred_element_type=jnp.float32) + b_s2_ref[...])  # (1, 48)
    states_ref[...] = jax.nn.sigmoid(s2)                              # -> (16, 3) outside

    # ---- prototype decoder: per-host MLP on t.view(16, 48) ----
    # In-VMEM relayout (1,768) -> (16,48): 16 static lane slices + sublane concat.
    t_lat = jnp.concatenate(
        [h[:, i * N_LATENT:(i + 1) * N_LATENT] for i in range(N_HOSTS)],
        axis=0).astype(jnp.bfloat16)                                  # (16, 48)

    q = (jnp.dot(t_lat, w_p1_ref[...], preferred_element_type=jnp.float32)
         + b_p1_ref[...])                                             # (16, 32)
    q = (jnp.dot(q.astype(jnp.bfloat16), w_p2_ref[...],
                 preferred_element_type=jnp.float32) + b_p2_ref[...])  # (16, 32)
    p = (jnp.dot(q.astype(jnp.bfloat16), w_p3_ref[...],
                 preferred_element_type=jnp.float32) + b_p3_ref[...])  # (16, PROTO_DIM)
    protos_ref[...] = jax.nn.sigmoid(p)


def _init_linear(key, fan_in, fan_out):
    # Deterministic torch-like uniform(-1/sqrt(fan_in), 1/sqrt(fan_in)) init.
    kw, kb = jax.random.split(key)
    bound = 1.0 / (fan_in ** 0.5)
    w = jax.random.uniform(kw, (fan_in, fan_out), jnp.float32, -bound, bound)
    b = jax.random.uniform(kb, (1, fan_out), jnp.float32, -bound, bound)
    return w, b


def init_params(key):
    ks = jax.random.split(key, 6)
    w_enc, b_enc = _init_linear(ks[0], N_IN, N_ENC)          # 304 -> 768
    w_s1, b_s1 = _init_linear(ks[1], N_ENC, N_HIDDEN)        # 768 -> 32
    w_s2, b_s2 = _init_linear(ks[2], N_HIDDEN, N_FEATS)      # 32  -> 48
    w_p1, b_p1 = _init_linear(ks[3], N_LATENT, N_HIDDEN)     # 48  -> 32
    w_p2, b_p2 = _init_linear(ks[4], N_HIDDEN, N_HIDDEN)     # 32  -> 32
    w_p3, b_p3 = _init_linear(ks[5], N_HIDDEN, PROTO_DIM)    # 32  -> PROTO_DIM
    bf = jnp.bfloat16
    return {
        # bf16 weights (what the kernel DMAs); encoder split for fused concat
        "w_et": w_enc[:N_T, :].astype(bf),                   # (48, 768)
        "w_es": w_enc[N_T:, :].astype(bf),                   # (256, 768)
        "w_s1": w_s1.astype(bf), "w_s2": w_s2.astype(bf),
        "w_p1": w_p1.astype(bf), "w_p2": w_p2.astype(bf), "w_p3": w_p3.astype(bf),
        # f32 biases (tiny; keep full precision)
        "b_enc": b_enc, "b_s1": b_s1, "b_s2": b_s2,
        "b_p1": b_p1, "b_p2": b_p2, "b_p3": b_p3,
    }


def deepft_forward(t, s, params):
    # torch.cat((t.view(-1), s.view(-1))) is fused into the kernel: pass the two
    # operands separately (s.reshape is a free row-major metadata reshape).
    t_in = t.reshape(1, N_T).astype(jnp.bfloat16)
    s_in = s.reshape(1, N_S).astype(jnp.bfloat16)
    args = (t_in, s_in,
            params["w_et"], params["w_es"], params["b_enc"],
            params["w_s1"], params["b_s1"], params["w_s2"], params["b_s2"],
            params["w_p1"], params["b_p1"],
            params["w_p2"], params["b_p2"],
            params["w_p3"], params["b_p3"])
    vmem_spec = lambda: pl.BlockSpec(memory_space=pltpu.MemorySpace.VMEM)
    states_flat, protos = pl.pallas_call(
        _deepft_kernel,
        out_shape=(jax.ShapeDtypeStruct((1, N_FEATS), jnp.float32),         # states
                   jax.ShapeDtypeStruct((N_HOSTS, PROTO_DIM), jnp.float32)),  # prototypes
        in_specs=[vmem_spec() for _ in args],
        out_specs=(vmem_spec(), vmem_spec()),
    )(*args)
    states = states_flat.reshape(N_HOSTS, 3)
    prototypes = protos                     # row i == prototype_decoder(t[i])
    return states, prototypes


def _reference_forward(t, s, p):
    # Pure-JAX f32 reference using the same bf16-rounded weights (upcast), so the
    # only remaining deltas vs. the kernel are bf16 activation rounding / MXU math.
    f32 = jnp.float32
    w_enc = jnp.concatenate([p["w_et"].astype(f32), p["w_es"].astype(f32)], axis=0)
    x = jnp.concatenate([t.reshape(-1), s.reshape(-1)]).reshape(1, N_IN).astype(f32)
    h = x @ w_enc + p["b_enc"]                      # LeakyReLU(slope=1) == identity
    t_lat = h.reshape(N_HOSTS, N_LATENT)
    s1 = h @ p["w_s1"].astype(f32) + p["b_s1"]
    states = jax.nn.sigmoid(s1 @ p["w_s2"].astype(f32) + p["b_s2"]).reshape(N_HOSTS, 3)
    q = t_lat @ p["w_p1"].astype(f32) + p["b_p1"]
    q = q @ p["w_p2"].astype(f32) + p["b_p2"]
    protos = jax.nn.sigmoid(q @ p["w_p3"].astype(f32) + p["b_p3"])
    return states, protos


if __name__ == "__main__":
    key = jax.random.PRNGKey(0)
    k_t, k_s, k_p = jax.random.split(key, 3)
    t_in = jax.random.normal(k_t, (N_WINDOW, N_FEATS), jnp.float32)   # (1, 48)
    s_in = jax.random.normal(k_s, (N_HOSTS, N_HOSTS), jnp.float32)    # (16, 16)
    params = init_params(k_p)

    states, prototypes = deepft_forward(t_in, s_in, params)
    jax.block_until_ready((states, prototypes))

    states_ref, protos_ref = _reference_forward(t_in, s_in, params)
    assert states.shape == (N_HOSTS, 3) and prototypes.shape == (N_HOSTS, PROTO_DIM)
    # bf16 activations/MXU vs f32 reference: loosened tolerance (sigmoid outputs).
    assert jnp.allclose(states, states_ref, atol=2e-2, rtol=2e-2)
    assert jnp.allclose(prototypes, protos_ref, atol=2e-2, rtol=2e-2)
    print("KERNEL_OK")
</pallas_src>

<mosaic_0001>
module attributes {stable_mosaic.version = 11 : i64} {
  func.func @_deepft_kernel(%arg0: memref<1x48xbf16, #tpu.memory_space<vmem>>, %arg1: memref<1x256xbf16, #tpu.memory_space<vmem>>, %arg2: memref<48x768xbf16, #tpu.memory_space<vmem>>, %arg3: memref<256x768xbf16, #tpu.memory_space<vmem>>, %arg4: memref<1x768xf32, #tpu.memory_space<vmem>>, %arg5: memref<768x32xbf16, #tpu.memory_space<vmem>>, %arg6: memref<1x32xf32, #tpu.memory_space<vmem>>, %arg7: memref<32x48xbf16, #tpu.memory_space<vmem>>, %arg8: memref<1x48xf32, #tpu.memory_space<vmem>>, %arg9: memref<48x32xbf16, #tpu.memory_space<vmem>>, %arg10: memref<1x32xf32, #tpu.memory_space<vmem>>, %arg11: memref<32x32xbf16, #tpu.memory_space<vmem>>, %arg12: memref<1x32xf32, #tpu.memory_space<vmem>>, %arg13: memref<32x8xbf16, #tpu.memory_space<vmem>>, %arg14: memref<1x8xf32, #tpu.memory_space<vmem>>, %arg15: memref<1x48xf32, #tpu.memory_space<vmem>>, %arg16: memref<16x8xf32, #tpu.memory_space<vmem>>) attributes {dimension_semantics = [], scalar_prefetch = 0 : i64, scratch_operands = 0 : i64, tpu.core_type = #tpu.core_type<tc>} {
    %c0 = arith.constant 0 : index
    %c0_0 = arith.constant 0 : index
    %0 = vector.load %arg0[%c0, %c0_0] : memref<1x48xbf16, #tpu.memory_space<vmem>>, vector<1x48xbf16>
    %c0_1 = arith.constant 0 : index
    %c0_2 = arith.constant 0 : index
    %1 = vector.load %arg2[%c0_1, %c0_2] : memref<48x768xbf16, #tpu.memory_space<vmem>>, vector<48x768xbf16>
    %cst = arith.constant dense<0.000000e+00> : vector<1x768xf32>
    %2 = tpu.matmul %0, %1, %cst {dimension_numbers = #tpu.dot_dimension_numbers<[1], [0], [0], [1], [0, 0, 1, 1], [], []>} : vector<1x48xbf16>, vector<48x768xbf16>, vector<1x768xf32> -> vector<1x768xf32>
    %c0_3 = arith.constant 0 : index
    %c0_4 = arith.constant 0 : index
    %3 = vector.load %arg1[%c0_3, %c0_4] : memref<1x256xbf16, #tpu.memory_space<vmem>>, vector<1x256xbf16>
    %c0_5 = arith.constant 0 : index
    %c0_6 = arith.constant 0 : index
    %4 = vector.load %arg3[%c0_5, %c0_6] : memref<256x768xbf16, #tpu.memory_space<vmem>>, vector<256x768xbf16>
    %cst_7 = arith.constant dense<0.000000e+00> : vector<1x768xf32>
    %5 = tpu.matmul %3, %4, %cst_7 {dimension_numbers = #tpu.dot_dimension_numbers<[1], [0], [0], [1], [0, 0, 1, 1], [], []>} : vector<1x256xbf16>, vector<256x768xbf16>, vector<1x768xf32> -> vector<1x768xf32>
    %6 = arith.addf %2, %5 : vector<1x768xf32>
    %c0_8 = arith.constant 0 : index
    %c0_9 = arith.constant 0 : index
    %7 = vector.load %arg4[%c0_8, %c0_9] : memref<1x768xf32, #tpu.memory_space<vmem>>, vector<1x768xf32>
    %8 = arith.addf %6, %7 : vector<1x768xf32>
    %9 = arith.truncf %8 : vector<1x768xf32> to vector<1x768xbf16>
    %c0_10 = arith.constant 0 : index
    %c0_11 = arith.constant 0 : index
    %10 = vector.load %arg5[%c0_10, %c0_11] : memref<768x32xbf16, #tpu.memory_space<vmem>>, vector<768x32xbf16>
    %cst_12 = arith.constant dense<0.000000e+00> : vector<1x32xf32>
    %11 = tpu.matmul %9, %10, %cst_12 {dimension_numbers = #tpu.dot_dimension_numbers<[1], [0], [0], [1], [0, 0, 1, 1], [], []>} : vector<1x768xbf16>, vector<768x32xbf16>, vector<1x32xf32> -> vector<1x32xf32>
    %c0_13 = arith.constant 0 : index
    %c0_14 = arith.constant 0 : index
    %12 = vector.load %arg6[%c0_13, %c0_14] : memref<1x32xf32, #tpu.memory_space<vmem>>, vector<1x32xf32>
    %13 = arith.addf %11, %12 : vector<1x32xf32>
    %14 = arith.truncf %13 : vector<1x32xf32> to vector<1x32xbf16>
    %c0_15 = arith.constant 0 : index
    %c0_16 = arith.constant 0 : index
    %15 = vector.load %arg7[%c0_15, %c0_16] : memref<32x48xbf16, #tpu.memory_space<vmem>>, vector<32x48xbf16>
    %cst_17 = arith.constant dense<0.000000e+00> : vector<1x48xf32>
    %16 = tpu.matmul %14, %15, %cst_17 {dimension_numbers = #tpu.dot_dimension_numbers<[1], [0], [0], [1], [0, 0, 1, 1], [], []>} : vector<1x32xbf16>, vector<32x48xbf16>, vector<1x48xf32> -> vector<1x48xf32>
    %c0_18 = arith.constant 0 : index
    %c0_19 = arith.constant 0 : index
    %17 = vector.load %arg8[%c0_18, %c0_19] : memref<1x48xf32, #tpu.memory_space<vmem>>, vector<1x48xf32>
    %18 = arith.addf %16, %17 : vector<1x48xf32>
    %19 = arith.negf %18 : vector<1x48xf32>
    %20 = math.exp %19 : vector<1x48xf32>
    %cst_20 = arith.constant 1.000000e+00 : f32
    %21 = vector.broadcast %cst_20 : f32 to vector<1x48xf32>
    %22 = arith.addf %21, %20 : vector<1x48xf32>
    %23 = arith.divf %21, %22 : vector<1x48xf32>
    %c0_21 = arith.constant 0 : index
    %c0_22 = arith.constant 0 : index
    %24 = vector.load %arg15[%c0_21, %c0_22] : memref<1x48xf32, #tpu.memory_space<vmem>>, vector<1x48xf32>
    tpu.vector_store %arg15[%c0_21, %c0_22], %23 {strides = array<i32>} : memref<1x48xf32, #tpu.memory_space<vmem>>, vector<1x48xf32>,
    %25 = vector.extract_strided_slice %8 {offsets = [0, 0], sizes = [1, 48], strides = [1, 1]} : vector<1x768xf32> to vector<1x48xf32>
    %26 = vector.extract_strided_slice %8 {offsets = [0, 48], sizes = [1, 48], strides = [1, 1]} : vector<1x768xf32> to vector<1x48xf32>
    %27 = vector.extract_strided_slice %8 {offsets = [0, 96], sizes = [1, 48], strides = [1, 1]} : vector<1x768xf32> to vector<1x48xf32>
    %28 = vector.extract_strided_slice %8 {offsets = [0, 144], sizes = [1, 48], strides = [1, 1]} : vector<1x768xf32> to vector<1x48xf32>
    %29 = vector.extract_strided_slice %8 {offsets = [0, 192], sizes = [1, 48], strides = [1, 1]} : vector<1x768xf32> to vector<1x48xf32>
    %30 = vector.extract_strided_slice %8 {offsets = [0, 240], sizes = [1, 48], strides = [1, 1]} : vector<1x768xf32> to vector<1x48xf32>
    %31 = vector.extract_strided_slice %8 {offsets = [0, 288], sizes = [1, 48], strides = [1, 1]} : vector<1x768xf32> to vector<1x48xf32>
    %32 = vector.extract_strided_slice %8 {offsets = [0, 336], sizes = [1, 48], strides = [1, 1]} : vector<1x768xf32> to vector<1x48xf32>
    %33 = vector.extract_strided_slice %8 {offsets = [0, 384], sizes = [1, 48], strides = [1, 1]} : vector<1x768xf32> to vector<1x48xf32>
    %34 = vector.extract_strided_slice %8 {offsets = [0, 432], sizes = [1, 48], strides = [1, 1]} : vector<1x768xf32> to vector<1x48xf32>
    %35 = vector.extract_strided_slice %8 {offsets = [0, 480], sizes = [1, 48], strides = [1, 1]} : vector<1x768xf32> to vector<1x48xf32>
    %36 = vector.extract_strided_slice %8 {offsets = [0, 528], sizes = [1, 48], strides = [1, 1]} : vector<1x768xf32> to vector<1x48xf32>
    %37 = vector.extract_strided_slice %8 {offsets = [0, 576], sizes = [1, 48], strides = [1, 1]} : vector<1x768xf32> to vector<1x48xf32>
    %38 = vector.extract_strided_slice %8 {offsets = [0, 624], sizes = [1, 48], strides = [1, 1]} : vector<1x768xf32> to vector<1x48xf32>
    %39 = vector.extract_strided_slice %8 {offsets = [0, 672], sizes = [1, 48], strides = [1, 1]} : vector<1x768xf32> to vector<1x48xf32>
    %40 = vector.extract_strided_slice %8 {offsets = [0, 720], sizes = [1, 48], strides = [1, 1]} : vector<1x768xf32> to vector<1x48xf32>
    %41 = tpu.concatenate %25, %26, %27, %28, %29, %30, %31, %32, %33, %34, %35, %36, %37, %38, %39, %40 in 0 : vector<1x48xf32>, vector<1x48xf32>, vector<1x48xf32>, vector<1x48xf32>, vector<1x48xf32>, vector<1x48xf32>, vector<1x48xf32>, vector<1x48xf32>, vector<1x48xf32>, vector<1x48xf32>, vector<1x48xf32>, vector<1x48xf32>, vector<1x48xf32>, vector<1x48xf32>, vector<1x48xf32>, vector<1x48xf32> -> vector<16x48xf32>
    %42 = arith.truncf %41 : vector<16x48xf32> to vector<16x48xbf16>
    %c0_23 = arith.constant 0 : index
    %c0_24 = arith.constant 0 : index
    %43 = vector.load %arg9[%c0_23, %c0_24] : memref<48x32xbf16, #tpu.memory_space<vmem>>, vector<48x32xbf16>
    %cst_25 = arith.constant dense<0.000000e+00> : vector<16x32xf32>
    %44 = tpu.matmul %42, %43, %cst_25 {dimension_numbers = #tpu.dot_dimension_numbers<[1], [0], [0], [1], [0, 0, 1, 1], [], []>} : vector<16x48xbf16>, vector<48x32xbf16>, vector<16x32xf32> -> vector<16x32xf32>
    %c0_26 = arith.constant 0 : index
    %c0_27 = arith.constant 0 : index
    %45 = vector.load %arg10[%c0_26, %c0_27] : memref<1x32xf32, #tpu.memory_space<vmem>>, vector<1x32xf32>
    %46 = vector.broadcast %45 : vector<1x32xf32> to vector<16x32xf32>
    %47 = arith.addf %44, %46 : vector<16x32xf32>
    %48 = arith.truncf %47 : vector<16x32xf32> to vector<16x32xbf16>
    %c0_28 = arith.constant 0 : index
    %c0_29 = arith.constant 0 : index
    %49 = vector.load %arg11[%c0_28, %c0_29] : memref<32x32xbf16, #tpu.memory_space<vmem>>, vector<32x32xbf16>
    %cst_30 = arith.constant dense<0.000000e+00> : vector<16x32xf32>
    %50 = tpu.matmul %48, %49, %cst_30 {dimension_numbers = #tpu.dot_dimension_numbers<[1], [0], [0], [1], [0, 0, 1, 1], [], []>} : vector<16x32xbf16>, vector<32x32xbf16>, vector<16x32xf32> -> vector<16x32xf32>
    %c0_31 = arith.constant 0 : index
    %c0_32 = arith.constant 0 : index
    %51 = vector.load %arg12[%c0_31, %c0_32] : memref<1x32xf32, #tpu.memory_space<vmem>>, vector<1x32xf32>
    %52 = vector.broadcast %51 : vector<1x32xf32> to vector<16x32xf32>
    %53 = arith.addf %50, %52 : vector<16x32xf32>
    %54 = arith.truncf %53 : vector<16x32xf32> to vector<16x32xbf16>
    %c0_33 = arith.constant 0 : index
    %c0_34 = arith.constant 0 : index
    %55 = vector.load %arg13[%c0_33, %c0_34] : memref<32x8xbf16, #tpu.memory_space<vmem>>, vector<32x8xbf16>
    %cst_35 = arith.constant dense<0.000000e+00> : vector<16x8xf32>
    %56 = tpu.matmul %54, %55, %cst_35 {dimension_numbers = #tpu.dot_dimension_numbers<[1], [0], [0], [1], [0, 0, 1, 1], [], []>} : vector<16x32xbf16>, vector<32x8xbf16>, vector<16x8xf32> -> vector<16x8xf32>
    %c0_36 = arith.constant 0 : index
    %c0_37 = arith.constant 0 : index
    %57 = vector.load %arg14[%c0_36, %c0_37] : memref<1x8xf32, #tpu.memory_space<vmem>>, vector<1x8xf32>
    %58 = vector.broadcast %57 : vector<1x8xf32> to vector<16x8xf32>
    %59 = arith.addf %56, %58 : vector<16x8xf32>
    %60 = arith.negf %59 : vector<16x8xf32>
    %61 = math.exp %60 : vector<16x8xf32>
    %cst_38 = arith.constant 1.000000e+00 : f32
    %62 = vector.broadcast %cst_38 : f32 to vector<16x8xf32>
    %63 = arith.addf %62, %61 : vector<16x8xf32>
    %64 = arith.divf %62, %63 : vector<16x8xf32>
    %c0_39 = arith.constant 0 : index
    %c0_40 = arith.constant 0 : index
    %65 = vector.load %arg16[%c0_39, %c0_40] : memref<16x8xf32, #tpu.memory_space<vmem>>, vector<16x8xf32>
    tpu.vector_store %arg16[%c0_39, %c0_40], %64 {strides = array<i32>} : memref<16x8xf32, #tpu.memory_space<vmem>>, vector<16x8xf32>,
    return
  }
}

</mosaic_0001>

<llo_original>
// kernel: tpu_custom_call.1
$region0: #{tpu_custom_call.1}
  #allocation0 [shape = 'u32[]', space=smem, size = 0x4, offset = 0x4, fixed_abs, tag = 'smem constant byte address 0x4 - core index']
  #allocation1 [shape = 'u32[144,128]{1,0:T(1,128)}', space=vmem, size = 0x12000, scoped, tag = 'internal scratch']
  %s0 = inlined_call_operand.vmem [shape: bf16[1,48], index: 0, kind: input, shape index: {}]
  %s1 = inlined_call_operand.vmem [shape: bf16[1,256], index: 1, kind: input, shape index: {}]
  %s2 = inlined_call_operand.vmem [shape: bf16[48,768], index: 2, kind: input, shape index: {}]
  %s3 = inlined_call_operand.hbm [shape: bf16[256,768], index: 3, kind: input, shape index: {}]
  %s4 = inlined_call_operand.vmem [shape: f32[1,768], index: 4, kind: input, shape index: {}]
  %s5 = inlined_call_operand.vmem [shape: bf16[768,32], index: 5, kind: input, shape index: {}]
  %s6 = inlined_call_operand.vmem [shape: f32[1,32], index: 6, kind: input, shape index: {}]
  %s7 = inlined_call_operand.vmem [shape: bf16[32,48], index: 7, kind: input, shape index: {}]
  %s8 = inlined_call_operand.vmem [shape: f32[1,48], index: 8, kind: input, shape index: {}]
  %s9 = inlined_call_operand.vmem [shape: bf16[48,32], index: 9, kind: input, shape index: {}]
  %s10 = inlined_call_operand.vmem [shape: f32[1,32], index: 10, kind: input, shape index: {}]
  %s11 = inlined_call_operand.vmem [shape: bf16[32,32], index: 11, kind: input, shape index: {}]
  %s12 = inlined_call_operand.vmem [shape: f32[1,32], index: 12, kind: input, shape index: {}]
  %s13 = inlined_call_operand.vmem [shape: bf16[32,8], index: 13, kind: input, shape index: {}]
  %s14 = inlined_call_operand.vmem [shape: f32[1,8], index: 14, kind: input, shape index: {}]
  %s15 = inlined_call_operand.hbm [shape: f32[1,48], index: 15, kind: output, shape index: {0}]
  %s16 = inlined_call_operand.vmem [shape: f32[16,8], index: 16, kind: output, shape index: {1}]
  %17 = xla_tuple %s15, %s16
  %s18 = sld [smem:[#allocation0]]
  $region82: #{tpu_custom_call.1} parent=0
    _
  %s20 = ssub.s32 1, %s18
  %s21 = scalar_select 0, %s20, %s18
  $region1: #{tpu_custom_call.1} parent=0
    #allocation2 [shape = 'u8[393216]{0}', space=vmem, size = 0x60000, scoped, tag = 'input window, operand 3, single buffered']
    #allocation3 [shape = 's32[1]{0}', space=sflag, size = 0x4, scoped, tag = 'scoped memory for tpu_custom_call.1']
    #allocation4 [shape = 's32[1]{0}', space=sflag, size = 0x4, scoped, tag = 'scoped memory for tpu_custom_call.1']
    #allocation5 [shape = 'u8[512]{0}', space=vmem, size = 0x400, scoped, tag = 'output window, operand 0, single buffered']
    %22 = vsyncpa [#allocation3], 0
    %23 = vsyncpa [#allocation4], 0
    // Predicated region
    $region2: #{tpu_custom_call.1} parent=1 // pred_check
      _
    $region3: #{tpu_custom_call.1} parent=1 // pred_check_branch
      %25 = sbr.rel (0) target = $region5
    $region4: #{tpu_custom_call.1} parent=1 // pred_region
      _
    $region5: #{tpu_custom_call.1} parent=1 // pred_fallthru
      _
    // Predicated region
    $region6: #{tpu_custom_call.1} parent=1 // pred_check
      _
    $region7: #{tpu_custom_call.1} parent=1 // pred_check_branch
      %27 = sbr.rel (0) target = $region9
    $region8: #{tpu_custom_call.1} parent=1 // pred_region
      _
    $region9: #{tpu_custom_call.1} parent=1 // pred_fallthru
      _
    // Predicated region
    $region10: #{tpu_custom_call.1} parent=1 // pred_check
      _
    $region11: #{tpu_custom_call.1} parent=1 // pred_check_branch
      %29 = sbr.rel (0) target = $region13
    $region12: #{tpu_custom_call.1} parent=1 // pred_region
      _
    $region13: #{tpu_custom_call.1} parent=1 // pred_fallthru
      _
    // Predicated region
    $region14: #{tpu_custom_call.1} parent=1 // pred_check
      _
    $region15: #{tpu_custom_call.1} parent=1 // pred_check_branch
      %31 = sbr.rel (0) target = $region17
    $region16: #{tpu_custom_call.1} parent=1 // pred_region
      %s33 = ssub.s32 12288, 12288
      %34 = vsyncadd [#allocation3], %s33
      %s35 = sshll.u32 [#allocation2], 4
      %s36 = int_to_ptr.vmem [resolvable:$true] %s35
      %41 = dma.hbm_to_vmem [thread:$0]  %s3, 12288, %s36, [#allocation3], 384, 384, 24
    $region17: #{tpu_custom_call.1} parent=1 // pred_fallthru
      _
    // Predicated region
    $region18: #{tpu_custom_call.1} parent=1 // pred_check
      _
    $region19: #{tpu_custom_call.1} parent=1 // pred_check_branch
      %43 = sbr.rel (0) target = $region21
    $region20: #{tpu_custom_call.1} parent=1 // pred_region
      _
    $region21: #{tpu_custom_call.1} parent=1 // pred_fallthru
      _
    // Predicated region
    $region22: #{tpu_custom_call.1} parent=1 // pred_check
      _
    $region23: #{tpu_custom_call.1} parent=1 // pred_check_branch
      %45 = sbr.rel (0) target = $region25
    $region24: #{tpu_custom_call.1} parent=1 // pred_region
      _
    $region25: #{tpu_custom_call.1} parent=1 // pred_fallthru
      _
    // Predicated region
    $region26: #{tpu_custom_call.1} parent=1 // pred_check
      _
    $region27: #{tpu_custom_call.1} parent=1 // pred_check_branch
      %47 = sbr.rel (0) target = $region29
    $region28: #{tpu_custom_call.1} parent=1 // pred_region
      _
    $region29: #{tpu_custom_call.1} parent=1 // pred_fallthru
      _
    // Predicated region
    $region30: #{tpu_custom_call.1} parent=1 // pred_check
      _
    $region31: #{tpu_custom_call.1} parent=1 // pred_check_branch
      %49 = sbr.rel (0) target = $region33
    $region32: #{tpu_custom_call.1} parent=1 // pred_region
      _
    $region33: #{tpu_custom_call.1} parent=1 // pred_fallthru
      _
    // Predicated region
    $region34: #{tpu_custom_call.1} parent=1 // pred_check
      _
    $region35: #{tpu_custom_call.1} parent=1 // pred_check_branch
      %51 = sbr.rel (0) target = $region37
    $region36: #{tpu_custom_call.1} parent=1 // pred_region
      _
    $region37: #{tpu_custom_call.1} parent=1 // pred_fallthru
      _
    // Predicated region
    $region38: #{tpu_custom_call.1} parent=1 // pred_check
      _
    $region39: #{tpu_custom_call.1} parent=1 // pred_check_branch
      %53 = sbr.rel (0) target = $region41
    $region40: #{tpu_custom_call.1} parent=1 // pred_region
      _
    $region41: #{tpu_custom_call.1} parent=1 // pred_fallthru
      _
    // Predicated region
    $region42: #{tpu_custom_call.1} parent=1 // pred_check
      _
    $region43: #{tpu_custom_call.1} parent=1 // pred_check_branch
      %55 = sbr.rel (0) target = $region45
    $region44: #{tpu_custom_call.1} parent=1 // pred_region
      _
    $region45: #{tpu_custom_call.1} parent=1 // pred_fallthru
      _
    // Predicated region
    $region46: #{tpu_custom_call.1} parent=1 // pred_check
      _
    $region47: #{tpu_custom_call.1} parent=1 // pred_check_branch
      %57 = sbr.rel (0) target = $region49
    $region48: #{tpu_custom_call.1} parent=1 // pred_region
      _
    $region49: #{tpu_custom_call.1} parent=1 // pred_fallthru
      _
    // Predicated region
    $region50: #{tpu_custom_call.1} parent=1 // pred_check
      _
    $region51: #{tpu_custom_call.1} parent=1 // pred_check_branch
      %59 = sbr.rel (0) target = $region53
    $region52: #{tpu_custom_call.1} parent=1 // pred_region
      _
    $region53: #{tpu_custom_call.1} parent=1 // pred_fallthru
      _
    // Predicated region
    $region54: #{tpu_custom_call.1} parent=1 // pred_check
      _
    $region55: #{tpu_custom_call.1} parent=1 // pred_check_branch
      %61 = sbr.rel (0) target = $region57
    $region56: #{tpu_custom_call.1} parent=1 // pred_region
      _
    $region57: #{tpu_custom_call.1} parent=1 // pred_fallthru
      _
    // Predicated region
    $region58: #{tpu_custom_call.1} parent=1 // pred_check
      _
    $region59: #{tpu_custom_call.1} parent=1 // pred_check_branch
      %63 = sbr.rel (0) target = $region61
    $region60: #{tpu_custom_call.1} parent=1 // pred_region
      _
    $region61: #{tpu_custom_call.1} parent=1 // pred_fallthru
      _
    // Predicated region
    $region62: #{tpu_custom_call.1} parent=1 // pred_check
      _
    $region63: #{tpu_custom_call.1} parent=1 // pred_check_branch
      %65 = sbr.rel (0) target = $region65
    $region64: #{tpu_custom_call.1} parent=1 // pred_region
      %66 = dma.done [#allocation3], 12288
    $region65: #{tpu_custom_call.1} parent=1 // pred_fallthru
      _
    %v68 = vld [vmem:[%s0] sm:$0x1]
    %v69 = vld [vmem:[%s2] sm:$0xff]
    %v70 = vld [vmem:[%s2 + $0x8] sm:$0xff]
    %v71 = vld [vmem:[%s2 + $0x10] sm:$0xff]
    %v72 = vld [vmem:[%s2 + $0x18] sm:$0xff]
    %v73 = vld [vmem:[%s2 + $0x20] sm:$0xff]
    %v74 = vld [vmem:[%s2 + $0x28] sm:$0xff]
    %v75 = vld [vmem:[%s2 + $0x30] sm:$0xff]
    %v76 = vld [vmem:[%s2 + $0x38] sm:$0xff]
    %v77 = vld [vmem:[%s2 + $0x40] sm:$0xff]
    %v78 = vld [vmem:[%s2 + $0x48] sm:$0xff]
    %v79 = vld [vmem:[%s2 + $0x50] sm:$0xff]
    %v80 = vld [vmem:[%s2 + $0x58] sm:$0xff]
    %v81 = vld [vmem:[%s2 + $0x60] sm:$0xff]
    %v82 = vld [vmem:[%s2 + $0x68] sm:$0xff]
    %v83 = vld [vmem:[%s2 + $0x70] sm:$0xff]
    %v84 = vld [vmem:[%s2 + $0x78] sm:$0xff]
    %v85 = vld [vmem:[%s2 + $0x80] sm:$0xff]
    %v86 = vld [vmem:[%s2 + $0x88] sm:$0xff]
    %v87 = vld [vmem:[%s1] sm:$0x3]
    %v88 = vld [vmem:[#allocation2] sm:$0xff]
    %v89 = vld [vmem:[#allocation2 + $0x8] sm:$0xff]
    %v90 = vld [vmem:[#allocation2 + $0x10] sm:$0xff]
    %v91 = vld [vmem:[#allocation2 + $0x18] sm:$0xff]
    %v92 = vld [vmem:[#allocation2 + $0x20] sm:$0xff]
    %v93 = vld [vmem:[#allocation2 + $0x28] sm:$0xff]
    %v94 = vld [vmem:[#allocation2 + $0x30] sm:$0xff]
    %v95 = vld [vmem:[#allocation2 + $0x38] sm:$0xff]
    %v96 = vld [vmem:[#allocation2 + $0x40] sm:$0xff]
    %v97 = vld [vmem:[#allocation2 + $0x48] sm:$0xff]
    %v98 = vld [vmem:[#allocation2 + $0x50] sm:$0xff]
    %v99 = vld [vmem:[#allocation2 + $0x58] sm:$0xff]
    %v100 = vld [vmem:[#allocation2 + $0x60] sm:$0xff]
    %v101 = vld [vmem:[#allocation2 + $0x68] sm:$0xff]
    %v102 = vld [vmem:[#allocation2 + $0x70] sm:$0xff]
    %v103 = vld [vmem:[#allocation2 + $0x78] sm:$0xff]
    %v104 = vld [vmem:[#allocation2 + $0x80] sm:$0xff]
    %v105 = vld [vmem:[#allocation2 + $0x88] sm:$0xff]
    %v106 = vld [vmem:[#allocation2 + $0x90] sm:$0xff]
    %v107 = vld [vmem:[#allocation2 + $0x98] sm:$0xff]
    %v108 = vld [vmem:[#allocation2 + $0xa0] sm:$0xff]
    %v109 = vld [vmem:[#allocation2 + $0xa8] sm:$0xff]
    %v110 = vld [vmem:[#allocation2 + $0xb0] sm:$0xff]
    %v111 = vld [vmem:[#allocation2 + $0xb8] sm:$0xff]
    %v112 = vld [vmem:[#allocation2 + $0xc0] sm:$0xff]
    %v113 = vld [vmem:[#allocation2 + $0xc8] sm:$0xff]
    %v114 = vld [vmem:[#allocation2 + $0xd0] sm:$0xff]
    %v115 = vld [vmem:[#allocation2 + $0xd8] sm:$0xff]
    %v116 = vld [vmem:[#allocation2 + $0xe0] sm:$0xff]
    %v117 = vld [vmem:[#allocation2 + $0xe8] sm:$0xff]
    %v118 = vld [vmem:[#allocation2 + $0xf0] sm:$0xff]
    %v119 = vld [vmem:[#allocation2 + $0xf8] sm:$0xff]
    %v120 = vld [vmem:[#allocation2 + $0x100] sm:$0xff]
    %v121 = vld [vmem:[#allocation2 + $0x108] sm:$0xff]
    %v122 = vld [vmem:[#allocation2 + $0x110] sm:$0xff]
    %v123 = vld [vmem:[#allocation2 + $0x118] sm:$0xff]
    %v124 = vld [vmem:[#allocation2 + $0x120] sm:$0xff]
    %v125 = vld [vmem:[#allocation2 + $0x128] sm:$0xff]
    %v126 = vld [vmem:[#allocation2 + $0x130] sm:$0xff]
    %v127 = vld [vmem:[#allocation2 + $0x138] sm:$0xff]
    %v128 = vld [vmem:[#allocation2 + $0x140] sm:$0xff]
    %v129 = vld [vmem:[#allocation2 + $0x148] sm:$0xff]
    %v130 = vld [vmem:[#allocation2 + $0x150] sm:$0xff]
    %v131 = vld [vmem:[#allocation2 + $0x158] sm:$0xff]
    %v132 = vld [vmem:[#allocation2 + $0x160] sm:$0xff]
    %v133 = vld [vmem:[#allocation2 + $0x168] sm:$0xff]
    %v134 = vld [vmem:[#allocation2 + $0x170] sm:$0xff]
    %v135 = vld [vmem:[#allocation2 + $0x178] sm:$0xff]
    %v136 = vld [vmem:[#allocation2 + $0x180] sm:$0xff]
    %v137 = vld [vmem:[#allocation2 + $0x188] sm:$0xff]
    %v138 = vld [vmem:[#allocation2 + $0x190] sm:$0xff]
    %v139 = vld [vmem:[#allocation2 + $0x198] sm:$0xff]
    %v140 = vld [vmem:[#allocation2 + $0x1a0] sm:$0xff]
    %v141 = vld [vmem:[#allocation2 + $0x1a8] sm:$0xff]
    %v142 = vld [vmem:[#allocation2 + $0x1b0] sm:$0xff]
    %v143 = vld [vmem:[#allocation2 + $0x1b8] sm:$0xff]
    %v144 = vld [vmem:[#allocation2 + $0x1c0] sm:$0xff]
    %v145 = vld [vmem:[#allocation2 + $0x1c8] sm:$0xff]
    %v146 = vld [vmem:[#allocation2 + $0x1d0] sm:$0xff]
    %v147 = vld [vmem:[#allocation2 + $0x1d8] sm:$0xff]
    %v148 = vld [vmem:[#allocation2 + $0x1e0] sm:$0xff]
    %v149 = vld [vmem:[#allocation2 + $0x1e8] sm:$0xff]
    %v150 = vld [vmem:[#allocation2 + $0x1f0] sm:$0xff]
    %v151 = vld [vmem:[#allocation2 + $0x1f8] sm:$0xff]
    %v152 = vld [vmem:[#allocation2 + $0x200] sm:$0xff]
    %v153 = vld [vmem:[#allocation2 + $0x208] sm:$0xff]
    %v154 = vld [vmem:[#allocation2 + $0x210] sm:$0xff]
    %v155 = vld [vmem:[#allocation2 + $0x218] sm:$0xff]
    %v156 = vld [vmem:[#allocation2 + $0x220] sm:$0xff]
    %v157 = vld [vmem:[#allocation2 + $0x228] sm:$0xff]
    %v158 = vld [vmem:[#allocation2 + $0x230] sm:$0xff]
    %v159 = vld [vmem:[#allocation2 + $0x238] sm:$0xff]
    %v160 = vld [vmem:[#allocation2 + $0x240] sm:$0xff]
    %v161 = vld [vmem:[#allocation2 + $0x248] sm:$0xff]
    %v162 = vld [vmem:[#allocation2 + $0x250] sm:$0xff]
    %v163 = vld [vmem:[#allocation2 + $0x258] sm:$0xff]
    %v164 = vld [vmem:[#allocation2 + $0x260] sm:$0xff]
    %v165 = vld [vmem:[#allocation2 + $0x268] sm:$0xff]
    %v166 = vld [vmem:[#allocation2 + $0x270] sm:$0xff]
    %v167 = vld [vmem:[#allocation2 + $0x278] sm:$0xff]
    %v168 = vld [vmem:[#allocation2 + $0x280] sm:$0xff]
    %v169 = vld [vmem:[#allocation2 + $0x288] sm:$0xff]
    %v170 = vld [vmem:[#allocation2 + $0x290] sm:$0xff]
    %v171 = vld [vmem:[#allocation2 + $0x298] sm:$0xff]
    %v172 = vld [vmem:[#allocation2 + $0x2a0] sm:$0xff]
    %v173 = vld [vmem:[#allocation2 + $0x2a8] sm:$0xff]
    %v174 = vld [vmem:[#allocation2 + $0x2b0] sm:$0xff]
    %v175 = vld [vmem:[#allocation2 + $0x2b8] sm:$0xff]
    %v176 = vld [vmem:[#allocation2 + $0x2c0] sm:$0xff]
    %v177 = vld [vmem:[#allocation2 + $0x2c8] sm:$0xff]
    %v178 = vld [vmem:[#allocation2 + $0x2d0] sm:$0xff]
    %v179 = vld [vmem:[#allocation2 + $0x2d8] sm:$0xff]
    %v180 = vld [vmem:[#allocation2 + $0x2e0] sm:$0xff]
    %v181 = vld [vmem:[#allocation2 + $0x2e8] sm:$0xff]
    %v182 = vld [vmem:[#allocation2 + $0x2f0] sm:$0xff]
    %v183 = vld [vmem:[#allocation2 + $0x2f8] sm:$0xff]
    %v186 = vunpack.c.l.s4 1966171168
    %v187 = vunpack.c.0.s8 %v186
    %v188 = vlaneseq
    %v189 = vshrl.u32 %v188, 7
    %v190 = vsub.s32 %v187, %v189
    %v191 = vrot.slane %v87, %v190
    %v192 = vcombine.high %v191, %v191
    %v194 = vunpack.c.l.s4 1966171168
    %v195 = vunpack.c.0.s8 %v194
    %v196 = vlaneseq
    %v197 = vshrl.u32 %v196, 7
    %v198 = vsub.s32 %v195, %v197
    %v199 = vrot.slane %v191, %v198
    %v201 = vunpack.c.l.s4 1966171168
    %v202 = vunpack.c.0.s8 %v201
    %v203 = vlaneseq
    %v204 = vshrl.u32 %v203, 7
    %v205 = vsub.s32 %v202, %v204
    %v206 = vrot.slane %v192, %v205
    %v305 = vunpack.c.l.b16 %v88
    %v306 = vunpack.c.h.b16 %v88
    %v307 = vunpack.c.l.b16 %v89
    %v308 = vunpack.c.h.b16 %v89
    %v309 = vunpack.c.l.b16 %v90
    %v310 = vunpack.c.h.b16 %v90
    %v311 = vunpack.c.l.b16 %v91
    %v312 = vunpack.c.h.b16 %v91
    %v313 = vunpack.c.l.b16 %v92
    %v314 = vunpack.c.h.b16 %v92
    %v315 = vunpack.c.l.b16 %v93
    %v316 = vunpack.c.h.b16 %v93
    %v317 = vunpack.c.l.b16 %v94
    %v318 = vunpack.c.h.b16 %v94
    %v319 = vunpack.c.l.b16 %v95
    %v320 = vunpack.c.h.b16 %v95
    %v321 = vunpack.c.l.b16 %v96
    %v322 = vunpack.c.h.b16 %v96
    %v323 = vunpack.c.l.b16 %v97
    %v324 = vunpack.c.h.b16 %v97
    %v325 = vunpack.c.l.b16 %v98
    %v326 = vunpack.c.h.b16 %v98
    %v327 = vunpack.c.l.b16 %v99
    %v328 = vunpack.c.h.b16 %v99
    %v329 = vunpack.c.l.b16 %v100
    %v330 = vunpack.c.h.b16 %v100
    %v331 = vunpack.c.l.b16 %v101
    %v332 = vunpack.c.h.b16 %v101
    %v333 = vunpack.c.l.b16 %v102
    %v334 = vunpack.c.h.b16 %v102
    %v335 = vunpack.c.l.b16 %v103
    %v336 = vunpack.c.h.b16 %v103
    %v337 = vunpack.c.l.b16 %v104
    %v338 = vunpack.c.h.b16 %v104
    %v339 = vunpack.c.l.b16 %v105
    %v340 = vunpack.c.h.b16 %v105
    %v341 = vunpack.c.l.b16 %v106
    %v342 = vunpack.c.h.b16 %v106
    %v343 = vunpack.c.l.b16 %v107
    %v344 = vunpack.c.h.b16 %v107
    %v345 = vunpack.c.l.b16 %v108
    %v346 = vunpack.c.h.b16 %v108
    %v347 = vunpack.c.l.b16 %v109
    %v348 = vunpack.c.h.b16 %v109
    %v349 = vunpack.c.l.b16 %v110
    %v350 = vunpack.c.h.b16 %v110
    %v351 = vunpack.c.l.b16 %v111
    %v352 = vunpack.c.h.b16 %v111
    %v353 = vunpack.c.l.b16 %v112
    %v354 = vunpack.c.h.b16 %v112
    %v355 = vunpack.c.l.b16 %v113
    %v356 = vunpack.c.h.b16 %v113
    %v357 = vunpack.c.l.b16 %v114
    %v358 = vunpack.c.h.b16 %v114
    %v359 = vunpack.c.l.b16 %v115
    %v360 = vunpack.c.h.b16 %v115
    %v361 = vunpack.c.l.b16 %v116
    %v362 = vunpack.c.h.b16 %v116
    %v363 = vunpack.c.l.b16 %v117
    %v364 = vunpack.c.h.b16 %v117
    %v365 = vunpack.c.l.b16 %v118
    %v366 = vunpack.c.h.b16 %v118
    %v367 = vunpack.c.l.b16 %v119
    %v368 = vunpack.c.h.b16 %v119
    %v369 = vunpack.c.l.b16 %v120
    %v370 = vunpack.c.h.b16 %v120
    %v371 = vunpack.c.l.b16 %v121
    %v372 = vunpack.c.h.b16 %v121
    %v373 = vunpack.c.l.b16 %v122
    %v374 = vunpack.c.h.b16 %v122
    %v375 = vunpack.c.l.b16 %v123
    %v376 = vunpack.c.h.b16 %v123
    %v377 = vunpack.c.l.b16 %v124
    %v378 = vunpack.c.h.b16 %v124
    %v379 = vunpack.c.l.b16 %v125
    %v380 = vunpack.c.h.b16 %v125
    %v381 = vunpack.c.l.b16 %v126
    %v382 = vunpack.c.h.b16 %v126
    %v383 = vunpack.c.l.b16 %v127
    %v384 = vunpack.c.h.b16 %v127
    %v385 = vunpack.c.l.b16 %v128
    %v386 = vunpack.c.h.b16 %v128
    %v387 = vunpack.c.l.b16 %v129
    %v388 = vunpack.c.h.b16 %v129
    %v389 = vunpack.c.l.b16 %v130
    %v390 = vunpack.c.h.b16 %v130
    %v391 = vunpack.c.l.b16 %v131
    %v392 = vunpack.c.h.b16 %v131
    %v393 = vunpack.c.l.b16 %v132
    %v394 = vunpack.c.h.b16 %v132
    %v395 = vunpack.c.l.b16 %v133
    %v396 = vunpack.c.h.b16 %v133
    %v397 = vunpack.c.l.b16 %v134
    %v398 = vunpack.c.h.b16 %v134
    %v399 = vunpack.c.l.b16 %v135
    %v400 = vunpack.c.h.b16 %v135
    %v401 = vunpack.c.l.b16 %v136
    %v402 = vunpack.c.h.b16 %v136
    %v403 = vunpack.c.l.b16 %v137
    %v404 = vunpack.c.h.b16 %v137
    %v405 = vunpack.c.l.b16 %v138
    %v406 = vunpack.c.h.b16 %v138
    %v407 = vunpack.c.l.b16 %v139
    %v408 = vunpack.c.h.b16 %v139
    %v409 = vunpack.c.l.b16 %v140
    %v410 = vunpack.c.h.b16 %v140
    %v411 = vunpack.c.l.b16 %v141
    %v412 = vunpack.c.h.b16 %v141
    %v413 = vunpack.c.l.b16 %v142
    %v414 = vunpack.c.h.b16 %v142
    %v415 = vunpack.c.l.b16 %v143
    %v416 = vunpack.c.h.b16 %v143
    %v417 = vunpack.c.l.b16 %v144
    %v418 = vunpack.c.h.b16 %v144
    %v419 = vunpack.c.l.b16 %v145
    %v420 = vunpack.c.h.b16 %v145
    %v421 = vunpack.c.l.b16 %v146
    %v422 = vunpack.c.h.b16 %v146
    %v423 = vunpack.c.l.b16 %v147
    %v424 = vunpack.c.h.b16 %v147
    %v425 = vunpack.c.l.b16 %v148
    %v426 = vunpack.c.h.b16 %v148
    %v427 = vunpack.c.l.b16 %v149
    %v428 = vunpack.c.h.b16 %v149
    %v429 = vunpack.c.l.b16 %v150
    %v430 = vunpack.c.h.b16 %v150
    %v431 = vunpack.c.l.b16 %v151
    %v432 = vunpack.c.h.b16 %v151
    %v433 = vunpack.c.l.b16 %v152
    %v434 = vunpack.c.h.b16 %v152
    %v435 = vunpack.c.l.b16 %v153
    %v436 = vunpack.c.h.b16 %v153
    %v437 = vunpack.c.l.b16 %v154
    %v438 = vunpack.c.h.b16 %v154
    %v439 = vunpack.c.l.b16 %v155
    %v440 = vunpack.c.h.b16 %v155
    %v441 = vunpack.c.l.b16 %v156
    %v442 = vunpack.c.h.b16 %v156
    %v443 = vunpack.c.l.b16 %v157
    %v444 = vunpack.c.h.b16 %v157
    %v445 = vunpack.c.l.b16 %v158
    %v446 = vunpack.c.h.b16 %v158
    %v447 = vunpack.c.l.b16 %v159
    %v448 = vunpack.c.h.b16 %v159
    %v449 = vunpack.c.l.b16 %v160
    %v450 = vunpack.c.h.b16 %v160
    %v451 = vunpack.c.l.b16 %v161
    %v452 = vunpack.c.h.b16 %v161
    %v453 = vunpack.c.l.b16 %v162
    %v454 = vunpack.c.h.b16 %v162
    %v455 = vunpack.c.l.b16 %v163
    %v456 = vunpack.c.h.b16 %v163
    %v457 = vunpack.c.l.b16 %v164
    %v458 = vunpack.c.h.b16 %v164
    %v459 = vunpack.c.l.b16 %v165
    %v460 = vunpack.c.h.b16 %v165
    %v461 = vunpack.c.l.b16 %v166
    %v462 = vunpack.c.h.b16 %v166
    %v463 = vunpack.c.l.b16 %v167
    %v464 = vunpack.c.h.b16 %v167
    %v465 = vunpack.c.l.b16 %v168
    %v466 = vunpack.c.h.b16 %v168
    %v467 = vunpack.c.l.b16 %v169
    %v468 = vunpack.c.h.b16 %v169
    %v469 = vunpack.c.l.b16 %v170
    %v470 = vunpack.c.h.b16 %v170
    %v471 = vunpack.c.l.b16 %v171
    %v472 = vunpack.c.h.b16 %v171
    %v473 = vunpack.c.l.b16 %v172
    %v474 = vunpack.c.h.b16 %v172
    %v475 = vunpack.c.l.b16 %v173
    %v476 = vunpack.c.h.b16 %v173
    %v477 = vunpack.c.l.b16 %v174
    %v478 = vunpack.c.h.b16 %v174
    %v479 = vunpack.c.l.b16 %v175
    %v480 = vunpack.c.h.b16 %v175
    %v481 = vunpack.c.l.b16 %v176
    %v482 = vunpack.c.h.b16 %v176
    %v483 = vunpack.c.l.b16 %v177
    %v484 = vunpack.c.h.b16 %v177
    %v485 = vunpack.c.l.b16 %v178
    %v486 = vunpack.c.h.b16 %v178
    %v487 = vunpack.c.l.b16 %v179
    %v488 = vunpack.c.h.b16 %v179
    %v489 = vunpack.c.l.b16 %v180
    %v490 = vunpack.c.h.b16 %v180
    %v491 = vunpack.c.l.b16 %v181
    %v492 = vunpack.c.h.b16 %v181
    %v493 = vunpack.c.l.b16 %v182
    %v494 = vunpack.c.h.b16 %v182
    %v495 = vunpack.c.l.b16 %v183
    %v496 = vunpack.c.h.b16 %v183
    %v497 = vpack.c.b16 %v311, %v305
    %v498 = vpack.c.b16 %v312, %v306
    %v499 = vpack.c.b16 %v313, %v307
    %v500 = vpack.c.b16 %v314, %v308
    %v501 = vpack.c.b16 %v315, %v309
    %v502 = vpack.c.b16 %v316, %v310
    %v503 = vpack.c.b16 %v323, %v317
    %v504 = vpack.c.b16 %v324, %v318
    %v505 = vpack.c.b16 %v325, %v319
    %v506 = vpack.c.b16 %v326, %v320
    %v507 = vpack.c.b16 %v327, %v321
    %v508 = vpack.c.b16 %v328, %v322
    %v509 = vpack.c.b16 %v335, %v329
    %v510 = vpack.c.b16 %v336, %v330
    %v511 = vpack.c.b16 %v337, %v331
    %v512 = vpack.c.b16 %v338, %v332
    %v513 = vpack.c.b16 %v339, %v333
    %v514 = vpack.c.b16 %v340, %v334
    %v515 = vpack.c.b16 %v347, %v341
    %v516 = vpack.c.b16 %v348, %v342
    %v517 = vpack.c.b16 %v349, %v343
    %v518 = vpack.c.b16 %v350, %v344
    %v519 = vpack.c.b16 %v351, %v345
    %v520 = vpack.c.b16 %v352, %v346
    %v521 = vpack.c.b16 %v359, %v353
    %v522 = vpack.c.b16 %v360, %v354
    %v523 = vpack.c.b16 %v361, %v355
    %v524 = vpack.c.b16 %v362, %v356
    %v525 = vpack.c.b16 %v363, %v357
    %v526 = vpack.c.b16 %v364, %v358
    %v527 = vpack.c.b16 %v371, %v365
    %v528 = vpack.c.b16 %v372, %v366
    %v529 = vpack.c.b16 %v373, %v367
    %v530 = vpack.c.b16 %v374, %v368
    %v531 = vpack.c.b16 %v375, %v369
    %v532 = vpack.c.b16 %v376, %v370
    %v533 = vpack.c.b16 %v383, %v377
    %v534 = vpack.c.b16 %v384, %v378
    %v535 = vpack.c.b16 %v385, %v379
    %v536 = vpack.c.b16 %v386, %v380
    %v537 = vpack.c.b16 %v387, %v381
    %v538 = vpack.c.b16 %v388, %v382
    %v539 = vpack.c.b16 %v395, %v389
    %v540 = vpack.c.b16 %v396, %v390
    %v541 = vpack.c.b16 %v397, %v391
    %v542 = vpack.c.b16 %v398, %v392
    %v543 = vpack.c.b16 %v399, %v393
    %v544 = vpack.c.b16 %v400, %v394
    %v545 = vpack.c.b16 %v407, %v401
    %v546 = vpack.c.b16 %v408, %v402
    %v547 = vpack.c.b16 %v409, %v403
    %v548 = vpack.c.b16 %v410, %v404
    %v549 = vpack.c.b16 %v411, %v405
    %v550 = vpack.c.b16 %v412, %v406
    %v551 = vpack.c.b16 %v419, %v413
    %v552 = vpack.c.b16 %v420, %v414
    %v553 = vpack.c.b16 %v421, %v415
    %v554 = vpack.c.b16 %v422, %v416
    %v555 = vpack.c.b16 %v423, %v417
    %v556 = vpack.c.b16 %v424, %v418
    %v557 = vpack.c.b16 %v431, %v425
    %v558 = vpack.c.b16 %v432, %v426
    %v559 = vpack.c.b16 %v433, %v427
    %v560 = vpack.c.b16 %v434, %v428
    %v561 = vpack.c.b16 %v435, %v429
    %v562 = vpack.c.b16 %v436, %v430
    %v563 = vpack.c.b16 %v443, %v437
    %v564 = vpack.c.b16 %v444, %v438
    %v565 = vpack.c.b16 %v445, %v439
    %v566 = vpack.c.b16 %v446, %v440
    %v567 = vpack.c.b16 %v447, %v441
    %v568 = vpack.c.b16 %v448, %v442
    %v569 = vpack.c.b16 %v455, %v449
    %v570 = vpack.c.b16 %v456, %v450
    %v571 = vpack.c.b16 %v457, %v451
    %v572 = vpack.c.b16 %v458, %v452
    %v573 = vpack.c.b16 %v459, %v453
    %v574 = vpack.c.b16 %v460, %v454
    %v575 = vpack.c.b16 %v467, %v461
    %v576 = vpack.c.b16 %v468, %v462
    %v577 = vpack.c.b16 %v469, %v463
    %v578 = vpack.c.b16 %v470, %v464
    %v579 = vpack.c.b16 %v471, %v465
    %v580 = vpack.c.b16 %v472, %v466
    %v581 = vpack.c.b16 %v479, %v473
    %v582 = vpack.c.b16 %v480, %v474
    %v583 = vpack.c.b16 %v481, %v475
    %v584 = vpack.c.b16 %v482, %v476
    %v585 = vpack.c.b16 %v483, %v477
    %v586 = vpack.c.b16 %v484, %v478
    %v587 = vpack.c.b16 %v491, %v485
    %v588 = vpack.c.b16 %v492, %v486
    %v589 = vpack.c.b16 %v493, %v487
    %v590 = vpack.c.b16 %v494, %v488
    %v591 = vpack.c.b16 %v495, %v489
    %v592 = vpack.c.b16 %v496, %v490
    %689 = vmatprep.subr.bf16.mxu0 %v540
    %690 = vmatpush1.bf16.msra.mxu0 %v539
    %691 = vmatprep.subr.bf16.mxu0 %v534
    %692 = vmatpush1.bf16.msra.mxu0 %v533
    %693 = vmatprep.subr.bf16.mxu0 %v528
    %694 = vmatpush1.bf16.msra.mxu0 %v527
    %695 = vmatprep.subr.bf16.mxu0 %v522
    %696 = vmatpush1.bf16.msra.mxu0 %v521
    %697 = vmatprep.subr.bf16.mxu0 %v516
    %698 = vmatpush1.bf16.msra.mxu0 %v515
    %699 = vmatprep.subr.bf16.mxu0 %v510
    %700 = vmatpush1.bf16.msra.mxu0 %v509
    %701 = vmatprep.subr.bf16.mxu0 %v504
    %702 = vmatpush1.bf16.msra.mxu0 %v503
    %703 = vmatprep.subr.bf16.mxu0 %v498
    %704 = vmatpush1.bf16.msra.mxu0 %v497
    %705 = vmatprep.subr.bf16.mxu0 %v588
    %706 = vmatpush2.bf16.msra.mxu0 %v587
    %707 = vmatprep.subr.bf16.mxu0 %v582
    %708 = vmatpush2.bf16.msra.mxu0 %v581
    %709 = vmatprep.subr.bf16.mxu0 %v576
    %710 = vmatpush2.bf16.msra.mxu0 %v575
    %711 = vmatprep.subr.bf16.mxu0 %v570
    %712 = vmatpush2.bf16.msra.mxu0 %v569
    %713 = vmatprep.subr.bf16.mxu0 %v564
    %714 = vmatpush2.bf16.msra.mxu0 %v563
    %715 = vmatprep.subr.bf16.mxu0 %v558
    %716 = vmatpush2.bf16.msra.mxu0 %v557
    %717 = vmatprep.subr.bf16.mxu0 %v552
    %718 = vmatpush2.bf16.msra.mxu0 %v551
    %719 = vmatprep.subr.bf16.mxu0 %v546
    %720 = vmatpush2.bf16.msra.mxu0 %v545
    %721 = vmatprep.mubr.bf16.mxu0 %v206
    %722 = vmatmul.mubr.bf16.gmra.mxu0 %v199
    %v723 = vpop.f32.mrf.mxu0
    %v724 = vadd.f32 0.0, %v723
    %v725 = vpop.f32.mrf.mxu0
    %v726 = vadd.f32 0.0, %v725
    %v727 = vpop.f32.mrf.mxu0
    %v728 = vpop.f32.mrf.mxu0
    %729 = vdwg.mxu0
    %730 = vmatprep.subr.bf16.mxu0 %v542
    %731 = vmatpush1.bf16.msra.mxu0 %v541
    %732 = vmatprep.subr.bf16.mxu0 %v536
    %733 = vmatpush1.bf16.msra.mxu0 %v535
    %734 = vmatprep.subr.bf16.mxu0 %v530
    %735 = vmatpush1.bf16.msra.mxu0 %v529
    %736 = vmatprep.subr.bf16.mxu0 %v524
    %737 = vmatpush1.bf16.msra.mxu0 %v523
    %738 = vmatprep.subr.bf16.mxu0 %v518
    %739 = vmatpush1.bf16.msra.mxu0 %v517
    %740 = vmatprep.subr.bf16.mxu0 %v512
    %741 = vmatpush1.bf16.msra.mxu0 %v511
    %742 = vmatprep.subr.bf16.mxu0 %v506
    %743 = vmatpush1.bf16.msra.mxu0 %v505
    %744 = vmatprep.subr.bf16.mxu0 %v500
    %745 = vmatpush1.bf16.msra.mxu0 %v499
    %746 = vmatprep.subr.bf16.mxu0 %v590
    %747 = vmatpush2.bf16.msra.mxu0 %v589
    %748 = vmatprep.subr.bf16.mxu0 %v584
    %749 = vmatpush2.bf16.msra.mxu0 %v583
    %750 = vmatprep.subr.bf16.mxu0 %v578
    %751 = vmatpush2.bf16.msra.mxu0 %v577
    %752 = vmatprep.subr.bf16.mxu0 %v572
    %753 = vmatpush2.bf16.msra.mxu0 %v571
    %754 = vmatprep.subr.bf16.mxu0 %v566
    %755 = vmatpush2.bf16.msra.mxu0 %v565
    %756 = vmatprep.subr.bf16.mxu0 %v560
    %757 = vmatpush2.bf16.msra.mxu0 %v559
    %758 = vmatprep.subr.bf16.mxu0 %v554
    %759 = vmatpush2.bf16.msra.mxu0 %v553
    %760 = vmatprep.subr.bf16.mxu0 %v548
    %761 = vmatpush2.bf16.msra.mxu0 %v547
    %762 = vmatprep.mubr.bf16.mxu0 %v206
    %763 = vmatmul.mubr.bf16.gmra.mxu0 %v199
    %v764 = vpop.f32.mrf.mxu0
    %v765 = vadd.f32 0.0, %v764
    %v766 = vpop.f32.mrf.mxu0
    %v767 = vadd.f32 0.0, %v766
    %v768 = vpop.f32.mrf.mxu0
    %v769 = vpop.f32.mrf.mxu0
    %770 = vdwg.mxu0
    %771 = vmatprep.subr.bf16.mxu0 %v544
    %772 = vmatpush1.bf16.msra.mxu0 %v543
    %773 = vmatprep.subr.bf16.mxu0 %v538
    %774 = vmatpush1.bf16.msra.mxu0 %v537
    %775 = vmatprep.subr.bf16.mxu0 %v532
    %776 = vmatpush1.bf16.msra.mxu0 %v531
    %777 = vmatprep.subr.bf16.mxu0 %v526
    %778 = vmatpush1.bf16.msra.mxu0 %v525
    %779 = vmatprep.subr.bf16.mxu0 %v520
    %780 = vmatpush1.bf16.msra.mxu0 %v519
    %781 = vmatprep.subr.bf16.mxu0 %v514
    %782 = vmatpush1.bf16.msra.mxu0 %v513
    %783 = vmatprep.subr.bf16.mxu0 %v508
    %784 = vmatpush1.bf16.msra.mxu0 %v507
    %785 = vmatprep.subr.bf16.mxu0 %v502
    %786 = vmatpush1.bf16.msra.mxu0 %v501
    %787 = vmatprep.subr.bf16.mxu0 %v592
    %788 = vmatpush2.bf16.msra.mxu0 %v591
    %789 = vmatprep.subr.bf16.mxu0 %v586
    %790 = vmatpush2.bf16.msra.mxu0 %v585
    %791 = vmatprep.subr.bf16.mxu0 %v580
    %792 = vmatpush2.bf16.msra.mxu0 %v579
    %793 = vmatprep.subr.bf16.mxu0 %v574
    %794 = vmatpush2.bf16.msra.mxu0 %v573
    %795 = vmatprep.subr.bf16.mxu0 %v568
    %796 = vmatpush2.bf16.msra.mxu0 %v567
    %797 = vmatprep.subr.bf16.mxu0 %v562
    %798 = vmatpush2.bf16.msra.mxu0 %v561
    %799 = vmatprep.subr.bf16.mxu0 %v556
    %800 = vmatpush2.bf16.msra.mxu0 %v555
    %801 = vmatprep.subr.bf16.mxu0 %v550
    %802 = vmatpush2.bf16.msra.mxu0 %v549
    %803 = vmatprep.mubr.bf16.mxu0 %v206
    %804 = vmatmul.mubr.bf16.gmra.mxu0 %v199
    %v805 = vpop.f32.mrf.mxu0
    %v806 = vadd.f32 0.0, %v805
    %v807 = vpop.f32.mrf.mxu0
    %v808 = vadd.f32 0.0, %v807
    %v809 = vpop.f32.mrf.mxu0
    %v810 = vpop.f32.mrf.mxu0
    %811 = vdwg.mxu0
    %v830 = vunpack.c.l.b16 %v69
    %v831 = vunpack.c.h.b16 %v69
    %v832 = vunpack.c.l.b16 %v70
    %v833 = vunpack.c.h.b16 %v70
    %v834 = vunpack.c.l.b16 %v71
    %v835 = vunpack.c.h.b16 %v71
    %v836 = vunpack.c.l.b16 %v72
    %v837 = vunpack.c.h.b16 %v72
    %v838 = vunpack.c.l.b16 %v73
    %v839 = vunpack.c.h.b16 %v73
    %v840 = vunpack.c.l.b16 %v74
    %v841 = vunpack.c.h.b16 %v74
    %v842 = vunpack.c.l.b16 %v75
    %v843 = vunpack.c.h.b16 %v75
    %v844 = vunpack.c.l.b16 %v76
    %v845 = vunpack.c.h.b16 %v76
    %v846 = vunpack.c.l.b16 %v77
    %v847 = vunpack.c.h.b16 %v77
    %v848 = vunpack.c.l.b16 %v78
    %v849 = vunpack.c.h.b16 %v78
    %v850 = vunpack.c.l.b16 %v79
    %v851 = vunpack.c.h.b16 %v79
    %v852 = vunpack.c.l.b16 %v80
    %v853 = vunpack.c.h.b16 %v80
    %v854 = vunpack.c.l.b16 %v81
    %v855 = vunpack.c.h.b16 %v81
    %v856 = vunpack.c.l.b16 %v82
    %v857 = vunpack.c.h.b16 %v82
    %v858 = vunpack.c.l.b16 %v83
    %v859 = vunpack.c.h.b16 %v83
    %v860 = vunpack.c.l.b16 %v84
    %v861 = vunpack.c.h.b16 %v84
    %v862 = vunpack.c.l.b16 %v85
    %v863 = vunpack.c.h.b16 %v85
    %v864 = vunpack.c.l.b16 %v86
    %v865 = vunpack.c.h.b16 %v86
    %v866 = vpack.c.b16 %v836, %v830
    %v867 = vpack.c.b16 %v837, %v831
    %v868 = vpack.c.b16 %v838, %v832
    %v869 = vpack.c.b16 %v839, %v833
    %v870 = vpack.c.b16 %v840, %v834
    %v871 = vpack.c.b16 %v841, %v835
    %v872 = vpack.c.b16 %v848, %v842
    %v873 = vpack.c.b16 %v849, %v843
    %v874 = vpack.c.b16 %v850, %v844
    %v875 = vpack.c.b16 %v851, %v845
    %v876 = vpack.c.b16 %v852, %v846
    %v877 = vpack.c.b16 %v853, %v847
    %v878 = vpack.c.b16 %v860, %v854
    %v879 = vpack.c.b16 %v861, %v855
    %v880 = vpack.c.b16 %v862, %v856
    %v881 = vpack.c.b16 %v863, %v857
    %v882 = vpack.c.b16 %v864, %v858
    %v883 = vpack.c.b16 %v865, %v859
    %vm902 = vcmask 392192
    %v904 = vsel %vm902, %v68, 0
    %906 = vmatprep.subr.bf16.mxu0 0
    %907 = vmatpush1.bf16.msra.mxu0 0
    %908 = vmatprep.subr.bf16.mxu0 0
    %909 = vmatpush1.bf16.msra.mxu0 0
    %910 = vmatprep.subr.bf16.mxu0 0
    %911 = vmatpush1.bf16.msra.mxu0 0
    %912 = vmatprep.subr.bf16.mxu0 0
    %913 = vmatpush1.bf16.msra.mxu0 0
    %914 = vmatprep.subr.bf16.mxu0 0
    %915 = vmatpush1.bf16.msra.mxu0 0
    %916 = vmatprep.subr.bf16.mxu0 %v879
    %917 = vmatpush1.bf16.msra.mxu0 %v878
    %918 = vmatprep.subr.bf16.mxu0 %v873
    %919 = vmatpush1.bf16.msra.mxu0 %v872
    %920 = vmatprep.subr.bf16.mxu0 %v867
    %921 = vmatpush1.bf16.msra.mxu0 %v866
    %922 = vmatprep.subr.bf16.mxu0 0
    %923 = vmatpush2.bf16.msra.mxu0 0
    %924 = vmatprep.subr.bf16.mxu0 0
    %925 = vmatpush2.bf16.msra.mxu0 0
    %926 = vmatprep.subr.bf16.mxu0 0
    %927 = vmatpush2.bf16.msra.mxu0 0
    %928 = vmatprep.subr.bf16.mxu0 0
    %929 = vmatpush2.bf16.msra.mxu0 0
    %930 = vmatprep.subr.bf16.mxu0 0
    %931 = vmatpush2.bf16.msra.mxu0 0
    %932 = vmatprep.subr.bf16.mxu0 0
    %933 = vmatpush2.bf16.msra.mxu0 0
    %934 = vmatprep.subr.bf16.mxu0 0
    %935 = vmatpush2.bf16.msra.mxu0 0
    %936 = vmatprep.subr.bf16.mxu0 0
    %937 = vmatpush2.bf16.msra.mxu0 0
    %938 = vmatprep.mubr.bf16.mxu0 0
    %939 = vmatmul.mubr.bf16.gmra.mxu0 %v904
    %v940 = vpop.f32.mrf.mxu0
    %v941 = vadd.f32 %v724, %v940
    %v942 = vpop.f32.mrf.mxu0
    %v943 = vadd.f32 %v726, %v942
    %v944 = vpop.f32.mrf.mxu0
    %v945 = vpop.f32.mrf.mxu0
    %946 = vdwg.mxu0
    %947 = vmatprep.subr.bf16.mxu0 0
    %948 = vmatpush1.bf16.msra.mxu0 0
    %949 = vmatprep.subr.bf16.mxu0 0
    %950 = vmatpush1.bf16.msra.mxu0 0
    %951 = vmatprep.subr.bf16.mxu0 0
    %952 = vmatpush1.bf16.msra.mxu0 0
    %953 = vmatprep.subr.bf16.mxu0 0
    %954 = vmatpush1.bf16.msra.mxu0 0
    %955 = vmatprep.subr.bf16.mxu0 0
    %956 = vmatpush1.bf16.msra.mxu0 0
    %957 = vmatprep.subr.bf16.mxu0 %v881
    %958 = vmatpush1.bf16.msra.mxu0 %v880
    %959 = vmatprep.subr.bf16.mxu0 %v875
    %960 = vmatpush1.bf16.msra.mxu0 %v874
    %961 = vmatprep.subr.bf16.mxu0 %v869
    %962 = vmatpush1.bf16.msra.mxu0 %v868
    %963 = vmatprep.subr.bf16.mxu0 0
    %964 = vmatpush2.bf16.msra.mxu0 0
    %965 = vmatprep.subr.bf16.mxu0 0
    %966 = vmatpush2.bf16.msra.mxu0 0
    %967 = vmatprep.subr.bf16.mxu0 0
    %968 = vmatpush2.bf16.msra.mxu0 0
    %969 = vmatprep.subr.bf16.mxu0 0
    %970 = vmatpush2.bf16.msra.mxu0 0
    %971 = vmatprep.subr.bf16.mxu0 0
    %972 = vmatpush2.bf16.msra.mxu0 0
    %973 = vmatprep.subr.bf16.mxu0 0
    %974 = vmatpush2.bf16.msra.mxu0 0
    %975 = vmatprep.subr.bf16.mxu0 0
    %976 = vmatpush2.bf16.msra.mxu0 0
    %977 = vmatprep.subr.bf16.mxu0 0
    %978 = vmatpush2.bf16.msra.mxu0 0
    %979 = vmatprep.mubr.bf16.mxu0 0
    %980 = vmatmul.mubr.bf16.gmra.mxu0 %v904
    %v981 = vpop.f32.mrf.mxu0
    %v982 = vadd.f32 %v765, %v981
    %v983 = vpop.f32.mrf.mxu0
    %v984 = vadd.f32 %v767, %v983
    %v985 = vpop.f32.mrf.mxu0
    %v986 = vpop.f32.mrf.mxu0
    %987 = vdwg.mxu0
    %988 = vmatprep.subr.bf16.mxu0 0
    %989 = vmatpush1.bf16.msra.mxu0 0
    %990 = vmatprep.subr.bf16.mxu0 0
    %991 = vmatpush1.bf16.msra.mxu0 0
    %992 = vmatprep.subr.bf16.mxu0 0
    %993 = vmatpush1.bf16.msra.mxu0 0
    %994 = vmatprep.subr.bf16.mxu0 0
    %995 = vmatpush1.bf16.msra.mxu0 0
    %996 = vmatprep.subr.bf16.mxu0 0
    %997 = vmatpush1.bf16.msra.mxu0 0
    %998 = vmatprep.subr.bf16.mxu0 %v883
    %999 = vmatpush1.bf16.msra.mxu0 %v882
    %1000 = vmatprep.subr.bf16.mxu0 %v877
    %1001 = vmatpush1.bf16.msra.mxu0 %v876
    %1002 = vmatprep.subr.bf16.mxu0 %v871
    %1003 = vmatpush1.bf16.msra.mxu0 %v870
    %1004 = vmatprep.subr.bf16.mxu0 0
    %1005 = vmatpush2.bf16.msra.mxu0 0
    %1006 = vmatprep.subr.bf16.mxu0 0
    %1007 = vmatpush2.bf16.msra.mxu0 0
    %1008 = vmatprep.subr.bf16.mxu0 0
    %1009 = vmatpush2.bf16.msra.mxu0 0
    %1010 = vmatprep.subr.bf16.mxu0 0
    %1011 = vmatpush2.bf16.msra.mxu0 0
    %1012 = vmatprep.subr.bf16.mxu0 0
    %1013 = vmatpush2.bf16.msra.mxu0 0
    %1014 = vmatprep.subr.bf16.mxu0 0
    %1015 = vmatpush2.bf16.msra.mxu0 0
    %1016 = vmatprep.subr.bf16.mxu0 0
    %1017 = vmatpush2.bf16.msra.mxu0 0
    %1018 = vmatprep.subr.bf16.mxu0 0
    %1019 = vmatpush2.bf16.msra.mxu0 0
    %1020 = vmatprep.mubr.bf16.mxu0 0
    %1021 = vmatmul.mubr.bf16.gmra.mxu0 %v904
    %v1022 = vpop.f32.mrf.mxu0
    %v1023 = vadd.f32 %v806, %v1022
    %v1024 = vpop.f32.mrf.mxu0
    %v1025 = vadd.f32 %v808, %v1024
    %v1026 = vpop.f32.mrf.mxu0
    %v1027 = vpop.f32.mrf.mxu0
    %1028 = vdwg.mxu0
    %v1029 = vld [vmem:[%s4] sm:$0x3f]
    %v1031 = vlaneseq
    %v1032 = vshrl.u32 %v1031, 7
    %v1033 = vsub.s32 0, %v1032
    %v1034 = vrot.slane %v1029, %v1033
    %v1035 = vlaneseq
    %v1036 = vshrl.u32 %v1035, 7
    %v1037 = vsub.s32 1, %v1036
    %v1038 = vrot.slane %v1029, %v1037
    %v1039 = vlaneseq
    %v1040 = vshrl.u32 %v1039, 7
    %v1041 = vsub.s32 2, %v1040
    %v1042 = vrot.slane %v1029, %v1041
    %v1043 = vlaneseq
    %v1044 = vshrl.u32 %v1043, 7
    %v1045 = vsub.s32 3, %v1044
    %v1046 = vrot.slane %v1029, %v1045
    %v1047 = vlaneseq
    %v1048 = vshrl.u32 %v1047, 7
    %v1049 = vsub.s32 4, %v1048
    %v1050 = vrot.slane %v1029, %v1049
    %v1051 = vlaneseq
    %v1052 = vshrl.u32 %v1051, 7
    %v1053 = vsub.s32 5, %v1052
    %v1054 = vrot.slane %v1029, %v1053
    %v1061 = vadd.f32 %v941, %v1034
    %v1062 = vadd.f32 %v943, %v1038
    %v1063 = vadd.f32 %v982, %v1042
    %v1064 = vadd.f32 %v984, %v1046
    %v1065 = vadd.f32 %v1023, %v1050
    %v1066 = vadd.f32 %v1025, %v1054
    %v1067 = vpack.c.bf16 %v1061, %v1061
    %v1068 = vpack.c.bf16 %v1062, %v1062
    %v1069 = vpack.c.bf16 %v1063, %v1063
    %v1070 = vpack.c.bf16 %v1064, %v1064
    %v1071 = vpack.c.bf16 %v1065, %v1065
    %v1072 = vpack.c.bf16 %v1066, %v1066
    %v1073 = vld [vmem:[%s5] sm:$0xf]
    %v1074 = vld [vmem:[%s5 + $0x4] sm:$0xf]
    %v1075 = vld [vmem:[%s5 + $0x8] sm:$0xf]
    %v1076 = vld [vmem:[%s5 + $0xc] sm:$0xf]
    %v1077 = vld [vmem:[%s5 + $0x10] sm:$0xf]
    %v1078 = vld [vmem:[%s5 + $0x14] sm:$0xf]
    %v1079 = vld [vmem:[%s5 + $0x18] sm:$0xf]
    %v1080 = vld [vmem:[%s5 + $0x1c] sm:$0xf]
    %v1081 = vld [vmem:[%s5 + $0x20] sm:$0xf]
    %v1082 = vld [vmem:[%s5 + $0x24] sm:$0xf]
    %v1083 = vld [vmem:[%s5 + $0x28] sm:$0xf]
    %v1084 = vld [vmem:[%s5 + $0x2c] sm:$0xf]
    %v1085 = vld [vmem:[%s5 + $0x30] sm:$0xf]
    %v1086 = vld [vmem:[%s5 + $0x34] sm:$0xf]
    %v1087 = vld [vmem:[%s5 + $0x38] sm:$0xf]
    %v1088 = vld [vmem:[%s5 + $0x3c] sm:$0xf]
    %v1089 = vld [vmem:[%s5 + $0x40] sm:$0xf]
    %v1090 = vld [vmem:[%s5 + $0x44] sm:$0xf]
    %v1091 = vld [vmem:[%s5 + $0x48] sm:$0xf]
    %v1092 = vld [vmem:[%s5 + $0x4c] sm:$0xf]
    %v1093 = vld [vmem:[%s5 + $0x50] sm:$0xf]
    %v1094 = vld [vmem:[%s5 + $0x54] sm:$0xf]
    %v1095 = vld [vmem:[%s5 + $0x58] sm:$0xf]
    %v1096 = vld [vmem:[%s5 + $0x5c] sm:$0xf]
    %v1097 = vld [vmem:[%s5 + $0x60] sm:$0xf]
    %v1098 = vld [vmem:[%s5 + $0x64] sm:$0xf]
    %v1099 = vld [vmem:[%s5 + $0x68] sm:$0xf]
    %v1100 = vld [vmem:[%s5 + $0x6c] sm:$0xf]
    %v1101 = vld [vmem:[%s5 + $0x70] sm:$0xf]
    %v1102 = vld [vmem:[%s5 + $0x74] sm:$0xf]
    %v1103 = vld [vmem:[%s5 + $0x78] sm:$0xf]
    %v1104 = vld [vmem:[%s5 + $0x7c] sm:$0xf]
    %v1105 = vld [vmem:[%s5 + $0x80] sm:$0xf]
    %v1106 = vld [vmem:[%s5 + $0x84] sm:$0xf]
    %v1107 = vld [vmem:[%s5 + $0x88] sm:$0xf]
    %v1108 = vld [vmem:[%s5 + $0x8c] sm:$0xf]
    %v1109 = vld [vmem:[%s5 + $0x90] sm:$0xf]
    %v1110 = vld [vmem:[%s5 + $0x94] sm:$0xf]
    %v1111 = vld [vmem:[%s5 + $0x98] sm:$0xf]
    %v1112 = vld [vmem:[%s5 + $0x9c] sm:$0xf]
    %v1113 = vld [vmem:[%s5 + $0xa0] sm:$0xf]
    %v1114 = vld [vmem:[%s5 + $0xa4] sm:$0xf]
    %v1115 = vld [vmem:[%s5 + $0xa8] sm:$0xf]
    %v1116 = vld [vmem:[%s5 + $0xac] sm:$0xf]
    %v1117 = vld [vmem:[%s5 + $0xb0] sm:$0xf]
    %v1118 = vld [vmem:[%s5 + $0xb4] sm:$0xf]
    %v1119 = vld [vmem:[%s5 + $0xb8] sm:$0xf]
    %v1120 = vld [vmem:[%s5 + $0xbc] sm:$0xf]
    %v1121 = vld [vmem:[%s5 + $0xc0] sm:$0xf]
    %v1122 = vld [vmem:[%s5 + $0xc4] sm:$0xf]
    %v1123 = vld [vmem:[%s5 + $0xc8] sm:$0xf]
    %v1124 = vld [vmem:[%s5 + $0xcc] sm:$0xf]
    %v1125 = vld [vmem:[%s5 + $0xd0] sm:$0xf]
    %v1126 = vld [vmem:[%s5 + $0xd4] sm:$0xf]
    %v1127 = vld [vmem:[%s5 + $0xd8] sm:$0xf]
    %v1128 = vld [vmem:[%s5 + $0xdc] sm:$0xf]
    %v1129 = vld [vmem:[%s5 + $0xe0] sm:$0xf]
    %v1130 = vld [vmem:[%s5 + $0xe4] sm:$0xf]
    %v1131 = vld [vmem:[%s5 + $0xe8] sm:$0xf]
    %v1132 = vld [vmem:[%s5 + $0xec] sm:$0xf]
    %v1133 = vld [vmem:[%s5 + $0xf0] sm:$0xf]
    %v1134 = vld [vmem:[%s5 + $0xf4] sm:$0xf]
    %v1135 = vld [vmem:[%s5 + $0xf8] sm:$0xf]
    %v1136 = vld [vmem:[%s5 + $0xfc] sm:$0xf]
    %v1137 = vld [vmem:[%s5 + $0x100] sm:$0xf]
    %v1138 = vld [vmem:[%s5 + $0x104] sm:$0xf]
    %v1139 = vld [vmem:[%s5 + $0x108] sm:$0xf]
    %v1140 = vld [vmem:[%s5 + $0x10c] sm:$0xf]
    %v1141 = vld [vmem:[%s5 + $0x110] sm:$0xf]
    %v1142 = vld [vmem:[%s5 + $0x114] sm:$0xf]
    %v1143 = vld [vmem:[%s5 + $0x118] sm:$0xf]
    %v1144 = vld [vmem:[%s5 + $0x11c] sm:$0xf]
    %v1145 = vld [vmem:[%s5 + $0x120] sm:$0xf]
    %v1146 = vld [vmem:[%s5 + $0x124] sm:$0xf]
    %v1147 = vld [vmem:[%s5 + $0x128] sm:$0xf]
    %v1148 = vld [vmem:[%s5 + $0x12c] sm:$0xf]
    %v1149 = vld [vmem:[%s5 + $0x130] sm:$0xf]
    %v1150 = vld [vmem:[%s5 + $0x134] sm:$0xf]
    %v1151 = vld [vmem:[%s5 + $0x138] sm:$0xf]
    %v1152 = vld [vmem:[%s5 + $0x13c] sm:$0xf]
    %v1153 = vld [vmem:[%s5 + $0x140] sm:$0xf]
    %v1154 = vld [vmem:[%s5 + $0x144] sm:$0xf]
    %v1155 = vld [vmem:[%s5 + $0x148] sm:$0xf]
    %v1156 = vld [vmem:[%s5 + $0x14c] sm:$0xf]
    %v1157 = vld [vmem:[%s5 + $0x150] sm:$0xf]
    %v1158 = vld [vmem:[%s5 + $0x154] sm:$0xf]
    %v1159 = vld [vmem:[%s5 + $0x158] sm:$0xf]
    %v1160 = vld [vmem:[%s5 + $0x15c] sm:$0xf]
    %v1161 = vld [vmem:[%s5 + $0x160] sm:$0xf]
    %v1162 = vld [vmem:[%s5 + $0x164] sm:$0xf]
    %v1163 = vld [vmem:[%s5 + $0x168] sm:$0xf]
    %v1164 = vld [vmem:[%s5 + $0x16c] sm:$0xf]
    %v1165 = vld [vmem:[%s5 + $0x170] sm:$0xf]
    %v1166 = vld [vmem:[%s5 + $0x174] sm:$0xf]
    %v1167 = vld [vmem:[%s5 + $0x178] sm:$0xf]
    %v1168 = vld [vmem:[%s5 + $0x17c] sm:$0xf]
    %v1169 = vld [vmem:[%s6] sm:$0x1]
    %v1266 = vunpack.c.l.b16 %v1073
    %v1267 = vunpack.c.l.b16 %v1074
    %v1268 = vunpack.c.l.b16 %v1075
    %v1269 = vunpack.c.l.b16 %v1076
    %v1270 = vunpack.c.l.b16 %v1077
    %v1271 = vunpack.c.l.b16 %v1078
    %v1272 = vunpack.c.l.b16 %v1079
    %v1273 = vunpack.c.l.b16 %v1080
    %v1274 = vunpack.c.l.b16 %v1081
    %v1275 = vunpack.c.l.b16 %v1082
    %v1276 = vunpack.c.l.b16 %v1083
    %v1277 = vunpack.c.l.b16 %v1084
    %v1278 = vunpack.c.l.b16 %v1085
    %v1279 = vunpack.c.l.b16 %v1086
    %v1280 = vunpack.c.l.b16 %v1087
    %v1281 = vunpack.c.l.b16 %v1088
    %v1282 = vunpack.c.l.b16 %v1089
    %v1283 = vunpack.c.l.b16 %v1090
    %v1284 = vunpack.c.l.b16 %v1091
    %v1285 = vunpack.c.l.b16 %v1092
    %v1286 = vunpack.c.l.b16 %v1093
    %v1287 = vunpack.c.l.b16 %v1094
    %v1288 = vunpack.c.l.b16 %v1095
    %v1289 = vunpack.c.l.b16 %v1096
    %v1290 = vunpack.c.l.b16 %v1097
    %v1291 = vunpack.c.l.b16 %v1098
    %v1292 = vunpack.c.l.b16 %v1099
    %v1293 = vunpack.c.l.b16 %v1100
    %v1294 = vunpack.c.l.b16 %v1101
    %v1295 = vunpack.c.l.b16 %v1102
    %v1296 = vunpack.c.l.b16 %v1103
    %v1297 = vunpack.c.l.b16 %v1104
    %v1298 = vunpack.c.l.b16 %v1105
    %v1299 = vunpack.c.l.b16 %v1106
    %v1300 = vunpack.c.l.b16 %v1107
    %v1301 = vunpack.c.l.b16 %v1108
    %v1302 = vunpack.c.l.b16 %v1109
    %v1303 = vunpack.c.l.b16 %v1110
    %v1304 = vunpack.c.l.b16 %v1111
    %v1305 = vunpack.c.l.b16 %v1112
    %v1306 = vunpack.c.l.b16 %v1113
    %v1307 = vunpack.c.l.b16 %v1114
    %v1308 = vunpack.c.l.b16 %v1115
    %v1309 = vunpack.c.l.b16 %v1116
    %v1310 = vunpack.c.l.b16 %v1117
    %v1311 = vunpack.c.l.b16 %v1118
    %v1312 = vunpack.c.l.b16 %v1119
    %v1313 = vunpack.c.l.b16 %v1120
    %v1314 = vunpack.c.l.b16 %v1121
    %v1315 = vunpack.c.l.b16 %v1122
    %v1316 = vunpack.c.l.b16 %v1123
    %v1317 = vunpack.c.l.b16 %v1124
    %v1318 = vunpack.c.l.b16 %v1125
    %v1319 = vunpack.c.l.b16 %v1126
    %v1320 = vunpack.c.l.b16 %v1127
    %v1321 = vunpack.c.l.b16 %v1128
    %v1322 = vunpack.c.l.b16 %v1129
    %v1323 = vunpack.c.l.b16 %v1130
    %v1324 = vunpack.c.l.b16 %v1131
    %v1325 = vunpack.c.l.b16 %v1132
    %v1326 = vunpack.c.l.b16 %v1133
    %v1327 = vunpack.c.l.b16 %v1134
    %v1328 = vunpack.c.l.b16 %v1135
    %v1329 = vunpack.c.l.b16 %v1136
    %v1330 = vunpack.c.l.b16 %v1137
    %v1331 = vunpack.c.l.b16 %v1138
    %v1332 = vunpack.c.l.b16 %v1139
    %v1333 = vunpack.c.l.b16 %v1140
    %v1334 = vunpack.c.l.b16 %v1141
    %v1335 = vunpack.c.l.b16 %v1142
    %v1336 = vunpack.c.l.b16 %v1143
    %v1337 = vunpack.c.l.b16 %v1144
    %v1338 = vunpack.c.l.b16 %v1145
    %v1339 = vunpack.c.l.b16 %v1146
    %v1340 = vunpack.c.l.b16 %v1147
    %v1341 = vunpack.c.l.b16 %v1148
    %v1342 = vunpack.c.l.b16 %v1149
    %v1343 = vunpack.c.l.b16 %v1150
    %v1344 = vunpack.c.l.b16 %v1151
    %v1345 = vunpack.c.l.b16 %v1152
    %v1346 = vunpack.c.l.b16 %v1153
    %v1347 = vunpack.c.l.b16 %v1154
    %v1348 = vunpack.c.l.b16 %v1155
    %v1349 = vunpack.c.l.b16 %v1156
    %v1350 = vunpack.c.l.b16 %v1157
    %v1351 = vunpack.c.l.b16 %v1158
    %v1352 = vunpack.c.l.b16 %v1159
    %v1353 = vunpack.c.l.b16 %v1160
    %v1354 = vunpack.c.l.b16 %v1161
    %v1355 = vunpack.c.l.b16 %v1162
    %v1356 = vunpack.c.l.b16 %v1163
    %v1357 = vunpack.c.l.b16 %v1164
    %v1358 = vunpack.c.l.b16 %v1165
    %v1359 = vunpack.c.l.b16 %v1166
    %v1360 = vunpack.c.l.b16 %v1167
    %v1361 = vunpack.c.l.b16 %v1168
    %v1362 = vpack.c.b16 %v1267, %v1266
    %v1363 = vpack.c.b16 %v1269, %v1268
    %v1364 = vpack.c.b16 %v1271, %v1270
    %v1365 = vpack.c.b16 %v1273, %v1272
    %v1366 = vpack.c.b16 %v1275, %v1274
    %v1367 = vpack.c.b16 %v1277, %v1276
    %v1368 = vpack.c.b16 %v1279, %v1278
    %v1369 = vpack.c.b16 %v1281, %v1280
    %v1370 = vpack.c.b16 %v1283, %v1282
    %v1371 = vpack.c.b16 %v1285, %v1284
    %v1372 = vpack.c.b16 %v1287, %v1286
    %v1373 = vpack.c.b16 %v1289, %v1288
    %v1374 = vpack.c.b16 %v1291, %v1290
    %v1375 = vpack.c.b16 %v1293, %v1292
    %v1376 = vpack.c.b16 %v1295, %v1294
    %v1377 = vpack.c.b16 %v1297, %v1296
    %v1378 = vpack.c.b16 %v1299, %v1298
    %v1379 = vpack.c.b16 %v1301, %v1300
    %v1380 = vpack.c.b16 %v1303, %v1302
    %v1381 = vpack.c.b16 %v1305, %v1304
    %v1382 = vpack.c.b16 %v1307, %v1306
    %v1383 = vpack.c.b16 %v1309, %v1308
    %v1384 = vpack.c.b16 %v1311, %v1310
    %v1385 = vpack.c.b16 %v1313, %v1312
    %v1386 = vpack.c.b16 %v1315, %v1314
    %v1387 = vpack.c.b16 %v1317, %v1316
    %v1388 = vpack.c.b16 %v1319, %v1318
    %v1389 = vpack.c.b16 %v1321, %v1320
    %v1390 = vpack.c.b16 %v1323, %v1322
    %v1391 = vpack.c.b16 %v1325, %v1324
    %v1392 = vpack.c.b16 %v1327, %v1326
    %v1393 = vpack.c.b16 %v1329, %v1328
    %v1394 = vpack.c.b16 %v1331, %v1330
    %v1395 = vpack.c.b16 %v1333, %v1332
    %v1396 = vpack.c.b16 %v1335, %v1334
    %v1397 = vpack.c.b16 %v1337, %v1336
    %v1398 = vpack.c.b16 %v1339, %v1338
    %v1399 = vpack.c.b16 %v1341, %v1340
    %v1400 = vpack.c.b16 %v1343, %v1342
    %v1401 = vpack.c.b16 %v1345, %v1344
    %v1402 = vpack.c.b16 %v1347, %v1346
    %v1403 = vpack.c.b16 %v1349, %v1348
    %v1404 = vpack.c.b16 %v1351, %v1350
    %v1405 = vpack.c.b16 %v1353, %v1352
    %v1406 = vpack.c.b16 %v1355, %v1354
    %v1407 = vpack.c.b16 %v1357, %v1356
    %v1408 = vpack.c.b16 %v1359, %v1358
    %v1409 = vpack.c.b16 %v1361, %v1360
    %1458 = vmatprep.subr.bf16.mxu0 0
    %1459 = vmatpush1.bf16.msra.mxu0 %v1369
    %1460 = vmatprep.subr.bf16.mxu0 0
    %1461 = vmatpush1.bf16.msra.mxu0 %v1368
    %1462 = vmatprep.subr.bf16.mxu0 0
    %1463 = vmatpush1.bf16.msra.mxu0 %v1367
    %1464 = vmatprep.subr.bf16.mxu0 0
    %1465 = vmatpush1.bf16.msra.mxu0 %v1366
    %1466 = vmatprep.subr.bf16.mxu0 0
    %1467 = vmatpush1.bf16.msra.mxu0 %v1365
    %1468 = vmatprep.subr.bf16.mxu0 0
    %1469 = vmatpush1.bf16.msra.mxu0 %v1364
    %1470 = vmatprep.subr.bf16.mxu0 0
    %1471 = vmatpush1.bf16.msra.mxu0 %v1363
    %1472 = vmatprep.subr.bf16.mxu0 0
    %1473 = vmatpush1.bf16.msra.mxu0 %v1362
    %1474 = vmatprep.subr.bf16.mxu0 0
    %1475 = vmatpush2.bf16.msra.mxu0 %v1377
    %1476 = vmatprep.subr.bf16.mxu0 0
    %1477 = vmatpush2.bf16.msra.mxu0 %v1376
    %1478 = vmatprep.subr.bf16.mxu0 0
    %1479 = vmatpush2.bf16.msra.mxu0 %v1375
    %1480 = vmatprep.subr.bf16.mxu0 0
    %1481 = vmatpush2.bf16.msra.mxu0 %v1374
    %1482 = vmatprep.subr.bf16.mxu0 0
    %1483 = vmatpush2.bf16.msra.mxu0 %v1373
    %1484 = vmatprep.subr.bf16.mxu0 0
    %1485 = vmatpush2.bf16.msra.mxu0 %v1372
    %1486 = vmatprep.subr.bf16.mxu0 0
    %1487 = vmatpush2.bf16.msra.mxu0 %v1371
    %1488 = vmatprep.subr.bf16.mxu0 0
    %1489 = vmatpush2.bf16.msra.mxu0 %v1370
    %1490 = vmatprep.mubr.bf16.mxu0 %v1068
    %1491 = vmatmul.mubr.bf16.gmra.mxu0 %v1067
    %v1492 = vpop.f32.mrf.mxu0
    %v1493 = vadd.f32 %v1169, %v1492
    %v1494 = vpop.f32.mrf.mxu0
    %v1495 = vpop.f32.mrf.mxu0
    %v1496 = vpop.f32.mrf.mxu0
    %1497 = vdwg.mxu0
    %1498 = vmatprep.subr.bf16.mxu0 0
    %1499 = vmatpush1.bf16.msra.mxu0 %v1385
    %1500 = vmatprep.subr.bf16.mxu0 0
    %1501 = vmatpush1.bf16.msra.mxu0 %v1384
    %1502 = vmatprep.subr.bf16.mxu0 0
    %1503 = vmatpush1.bf16.msra.mxu0 %v1383
    %1504 = vmatprep.subr.bf16.mxu0 0
    %1505 = vmatpush1.bf16.msra.mxu0 %v1382
    %1506 = vmatprep.subr.bf16.mxu0 0
    %1507 = vmatpush1.bf16.msra.mxu0 %v1381
    %1508 = vmatprep.subr.bf16.mxu0 0
    %1509 = vmatpush1.bf16.msra.mxu0 %v1380
    %1510 = vmatprep.subr.bf16.mxu0 0
    %1511 = vmatpush1.bf16.msra.mxu0 %v1379
    %1512 = vmatprep.subr.bf16.mxu0 0
    %1513 = vmatpush1.bf16.msra.mxu0 %v1378
    %1514 = vmatprep.subr.bf16.mxu0 0
    %1515 = vmatpush2.bf16.msra.mxu0 %v1393
    %1516 = vmatprep.subr.bf16.mxu0 0
    %1517 = vmatpush2.bf16.msra.mxu0 %v1392
    %1518 = vmatprep.subr.bf16.mxu0 0
    %1519 = vmatpush2.bf16.msra.mxu0 %v1391
    %1520 = vmatprep.subr.bf16.mxu0 0
    %1521 = vmatpush2.bf16.msra.mxu0 %v1390
    %1522 = vmatprep.subr.bf16.mxu0 0
    %1523 = vmatpush2.bf16.msra.mxu0 %v1389
    %1524 = vmatprep.subr.bf16.mxu0 0
    %1525 = vmatpush2.bf16.msra.mxu0 %v1388
    %1526 = vmatprep.subr.bf16.mxu0 0
    %1527 = vmatpush2.bf16.msra.mxu0 %v1387
    %1528 = vmatprep.subr.bf16.mxu0 0
    %1529 = vmatpush2.bf16.msra.mxu0 %v1386
    %1530 = vmatprep.mubr.bf16.mxu0 %v1070
    %1531 = vmatmul.mubr.bf16.gmra.mxu0 %v1069
    %v1532 = vpop.f32.mrf.mxu0
    %v1533 = vadd.f32 %v1493, %v1532
    %v1534 = vpop.f32.mrf.mxu0
    %v1535 = vpop.f32.mrf.mxu0
    %v1536 = vpop.f32.mrf.mxu0
    %1537 = vdwg.mxu0
    %1538 = vmatprep.subr.bf16.mxu0 0
    %1539 = vmatpush1.bf16.msra.mxu0 %v1401
    %1540 = vmatprep.subr.bf16.mxu0 0
    %1541 = vmatpush1.bf16.msra.mxu0 %v1400
    %1542 = vmatprep.subr.bf16.mxu0 0
    %1543 = vmatpush1.bf16.msra.mxu0 %v1399
    %1544 = vmatprep.subr.bf16.mxu0 0
    %1545 = vmatpush1.bf16.msra.mxu0 %v1398
    %1546 = vmatprep.subr.bf16.mxu0 0
    %1547 = vmatpush1.bf16.msra.mxu0 %v1397
    %1548 = vmatprep.subr.bf16.mxu0 0
    %1549 = vmatpush1.bf16.msra.mxu0 %v1396
    %1550 = vmatprep.subr.bf16.mxu0 0
    %1551 = vmatpush1.bf16.msra.mxu0 %v1395
    %1552 = vmatprep.subr.bf16.mxu0 0
    %1553 = vmatpush1.bf16.msra.mxu0 %v1394
    %1554 = vmatprep.subr.bf16.mxu0 0
    %1555 = vmatpush2.bf16.msra.mxu0 %v1409
    %1556 = vmatprep.subr.bf16.mxu0 0
    %1557 = vmatpush2.bf16.msra.mxu0 %v1408
    %1558 = vmatprep.subr.bf16.mxu0 0
    %1559 = vmatpush2.bf16.msra.mxu0 %v1407
    %1560 = vmatprep.subr.bf16.mxu0 0
    %1561 = vmatpush2.bf16.msra.mxu0 %v1406
    %1562 = vmatprep.subr.bf16.mxu0 0
    %1563 = vmatpush2.bf16.msra.mxu0 %v1405
    %1564 = vmatprep.subr.bf16.mxu0 0
    %1565 = vmatpush2.bf16.msra.mxu0 %v1404
    %1566 = vmatprep.subr.bf16.mxu0 0
    %1567 = vmatpush2.bf16.msra.mxu0 %v1403
    %1568 = vmatprep.subr.bf16.mxu0 0
    %1569 = vmatpush2.bf16.msra.mxu0 %v1402
    %1570 = vmatprep.mubr.bf16.mxu0 %v1072
    %1571 = vmatmul.mubr.bf16.gmra.mxu0 %v1071
    %v1572 = vpop.f32.mrf.mxu0
    %v1573 = vadd.f32 %v1533, %v1572
    %v1574 = vpop.f32.mrf.mxu0
    %v1575 = vpop.f32.mrf.mxu0
    %v1576 = vpop.f32.mrf.mxu0
    %1577 = vdwg.mxu0
    %v1578 = vpack.c.bf16 %v1573, %v1573
    %v1579 = vld [vmem:[%s7] sm:$0xf]
    %v1580 = vld [vmem:[%s7 + $0x4] sm:$0xf]
    %v1581 = vld [vmem:[%s7 + $0x8] sm:$0xf]
    %v1582 = vld [vmem:[%s7 + $0xc] sm:$0xf]
    %v1583 = vld [vmem:[%s8] sm:$0x1]
    %v1588 = vunpack.c.l.b16 %v1579
    %v1589 = vunpack.c.l.b16 %v1580
    %v1590 = vunpack.c.l.b16 %v1581
    %v1591 = vunpack.c.l.b16 %v1582
    %v1592 = vpack.c.b16 %v1589, %v1588
    %v1593 = vpack.c.b16 %v1591, %v1590
    %vm1596 = vcmask 261120
    %v1598 = vsel %vm1596, %v1578, 0
    %1600 = vmatprep.subr.bf16.mxu0 0
    %1601 = vmatpush1.bf16.msra.mxu0 0
    %1602 = vmatprep.subr.bf16.mxu0 0
    %1603 = vmatpush1.bf16.msra.mxu0 0
    %1604 = vmatprep.subr.bf16.mxu0 0
    %1605 = vmatpush1.bf16.msra.mxu0 0
    %1606 = vmatprep.subr.bf16.mxu0 0
    %1607 = vmatpush1.bf16.msra.mxu0 0
    %1608 = vmatprep.subr.bf16.mxu0 0
    %1609 = vmatpush1.bf16.msra.mxu0 0
    %1610 = vmatprep.subr.bf16.mxu0 0
    %1611 = vmatpush1.bf16.msra.mxu0 0
    %1612 = vmatprep.subr.bf16.mxu0 0
    %1613 = vmatpush1.bf16.msra.mxu0 %v1593
    %1614 = vmatprep.subr.bf16.mxu0 0
    %1615 = vmatpush1.bf16.msra.mxu0 %v1592
    %1616 = vmatprep.subr.bf16.mxu0 0
    %1617 = vmatpush2.bf16.msra.mxu0 0
    %1618 = vmatprep.subr.bf16.mxu0 0
    %1619 = vmatpush2.bf16.msra.mxu0 0
    %1620 = vmatprep.subr.bf16.mxu0 0
    %1621 = vmatpush2.bf16.msra.mxu0 0
    %1622 = vmatprep.subr.bf16.mxu0 0
    %1623 = vmatpush2.bf16.msra.mxu0 0
    %1624 = vmatprep.subr.bf16.mxu0 0
    %1625 = vmatpush2.bf16.msra.mxu0 0
    %1626 = vmatprep.subr.bf16.mxu0 0
    %1627 = vmatpush2.bf16.msra.mxu0 0
    %1628 = vmatprep.subr.bf16.mxu0 0
    %1629 = vmatpush2.bf16.msra.mxu0 0
    %1630 = vmatprep.subr.bf16.mxu0 0
    %1631 = vmatpush2.bf16.msra.mxu0 0
    %1632 = vmatprep.mubr.bf16.mxu0 0
    %1633 = vmatmul.mubr.bf16.gmra.mxu0 %v1598
    %v1634 = vpop.f32.mrf.mxu0
    %v1635 = vadd.f32 %v1583, %v1634
    %v1636 = vpop.f32.mrf.mxu0
    %v1637 = vpop.f32.mrf.mxu0
    %v1638 = vpop.f32.mrf.mxu0
    %1639 = vdwg.mxu0
    %v1640 = vxor.u32 %v1635, 2147483648
    %v1641 = vmul.f32 %v1640, 1.442695
    %v1642 = vpow.pop %v1641
    %v1643 = vadd.f32 %v1642, 1.0
    %v1644 = vrcp.pop %v1643
    %v1645 = vmul.f32 1.0, %v1644
    %vm1646 = vcmask 385024
    %1647 = vst.msk [vmem:[#allocation5] sm:$0x1] %vm1646, %v1645
    %v1649 = vrot.slane %v1061, 7
    %1650 = vrot.lane.b32.xlu0 %v1649, 80
    %v1651 = vpop.permute.xlu0 %1650
    %v1654 = vrot.slane %v1061, 6
    %v1655 = vrot.slane %v1062, 6
    %1656 = vrot.lane.b32.xlu0 %v1654, 32
    %v1657 = vpop.permute.xlu0 %1656
    %1658 = vrot.lane.b32.xlu0 %v1655, 32
    %v1659 = vpop.permute.xlu0 %1658
    %v1660 = vsel %vm1596, %v1657, %v1659
    %v1662 = vrot.slane %v1062, 5
    %1663 = vrot.lane.b32.xlu0 %v1662, 112
    %v1664 = vpop.permute.xlu0 %1663
    %v1666 = vrot.slane %v1062, 4
    %1667 = vrot.lane.b32.xlu0 %v1666, 64
    %v1668 = vpop.permute.xlu0 %1667
    %v1671 = vrot.slane %v1062, 3
    %v1672 = vrot.slane %v1063, 3
    %1673 = vrot.lane.b32.xlu0 %v1671, 16
    %v1674 = vpop.permute.xlu0 %1673
    %1675 = vrot.lane.b32.xlu0 %v1672, 16
    %v1676 = vpop.permute.xlu0 %1675
    %vm1677 = vcmask 130048
    %v1678 = vsel %vm1677, %v1674, %v1676
    %v1680 = vrot.slane %v1063, 2
    %1681 = vrot.lane.b32.xlu0 %v1680, 96
    %v1682 = vpop.permute.xlu0 %1681
    %v1684 = vrot.slane %v1063, 1
    %1685 = vrot.lane.b32.xlu0 %v1684, 48
    %v1686 = vpop.permute.xlu0 %1685
    %v1689 = vrot.slane %v1064, 7
    %1690 = vrot.lane.b32.xlu0 %v1689, 80
    %v1691 = vpop.permute.xlu0 %1690
    %v1694 = vrot.slane %v1064, 6
    %v1695 = vrot.slane %v1065, 6
    %1696 = vrot.lane.b32.xlu0 %v1694, 32
    %v1697 = vpop.permute.xlu0 %1696
    %1698 = vrot.lane.b32.xlu0 %v1695, 32
    %v1699 = vpop.permute.xlu0 %1698
    %v1700 = vsel %vm1596, %v1697, %v1699
    %v1702 = vrot.slane %v1065, 5
    %1703 = vrot.lane.b32.xlu0 %v1702, 112
    %v1704 = vpop.permute.xlu0 %1703
    %v1706 = vrot.slane %v1065, 4
    %1707 = vrot.lane.b32.xlu0 %v1706, 64
    %v1708 = vpop.permute.xlu0 %1707
    %v1711 = vrot.slane %v1065, 3
    %v1712 = vrot.slane %v1066, 3
    %1713 = vrot.lane.b32.xlu0 %v1711, 16
    %v1714 = vpop.permute.xlu0 %1713
    %1715 = vrot.lane.b32.xlu0 %v1712, 16
    %v1716 = vpop.permute.xlu0 %1715
    %v1717 = vsel %vm1677, %v1714, %v1716
    %v1719 = vrot.slane %v1066, 2
    %1720 = vrot.lane.b32.xlu0 %v1719, 96
    %v1721 = vpop.permute.xlu0 %1720
    %v1723 = vrot.slane %v1066, 1
    %1724 = vrot.lane.b32.xlu0 %v1723, 48
    %v1725 = vpop.permute.xlu0 %1724
    %vm1727 = vcmask 1040384
    %v1728 = vsel %vm1727, %v1061, %v1651
    %vm1729 = vcmask 1041408
    %v1730 = vsel %vm1729, %v1728, %v1660
    %vm1731 = vcmask 1042432
    %v1732 = vsel %vm1731, %v1730, %v1664
    %vm1733 = vcmask 1043456
    %v1734 = vsel %vm1733, %v1732, %v1668
    %vm1735 = vcmask 1044480
    %v1736 = vsel %vm1735, %v1734, %v1678
    %vm1737 = vcmask 1045504
    %v1738 = vsel %vm1737, %v1736, %v1682
    %vm1739 = vcmask 1046528
    %v1740 = vsel %vm1739, %v1738, %v1686
    %v1741 = vsel %vm1727, %v1064, %v1691
    %v1742 = vsel %vm1729, %v1741, %v1700
    %v1743 = vsel %vm1731, %v1742, %v1704
    %v1744 = vsel %vm1733, %v1743, %v1708
    %v1745 = vsel %vm1735, %v1744, %v1717
    %v1746 = vsel %vm1737, %v1745, %v1721
    %v1747 = vsel %vm1739, %v1746, %v1725
    %v1748 = vpack.c.bf16 %v1747, %v1740
    %v1749 = vld [vmem:[%s9] sm:$0xf]
    %v1750 = vld [vmem:[%s9 + $0x4] sm:$0xf]
    %v1751 = vld [vmem:[%s9 + $0x8] sm:$0xf]
    %v1752 = vld [vmem:[%s9 + $0xc] sm:$0xf]
    %v1753 = vld [vmem:[%s9 + $0x10] sm:$0xf]
    %v1754 = vld [vmem:[%s9 + $0x14] sm:$0xf]
    %v1755 = vld [vmem:[%s10] sm:$0x1]
    %v1757 = vlaneseq
    %v1758 = vshrl.u32 %v1757, 7
    %v1759 = vsub.s32 0, %v1758
    %v1760 = vrot.slane %v1755, %v1759
    %v1768 = vunpack.c.l.b16 %v1749
    %v1769 = vunpack.c.l.b16 %v1750
    %v1770 = vunpack.c.l.b16 %v1751
    %v1771 = vunpack.c.l.b16 %v1752
    %v1772 = vunpack.c.l.b16 %v1753
    %v1773 = vunpack.c.l.b16 %v1754
    %v1774 = vpack.c.b16 %v1769, %v1768
    %v1775 = vpack.c.b16 %v1771, %v1770
    %v1776 = vpack.c.b16 %v1773, %v1772
    %v1781 = vsel %vm902, %v1748, 0
    %1783 = vmatprep.subr.bf16.mxu0 0
    %1784 = vmatpush1.bf16.msra.mxu0 0
    %1785 = vmatprep.subr.bf16.mxu0 0
    %1786 = vmatpush1.bf16.msra.mxu0 0
    %1787 = vmatprep.subr.bf16.mxu0 0
    %1788 = vmatpush1.bf16.msra.mxu0 0
    %1789 = vmatprep.subr.bf16.mxu0 0
    %1790 = vmatpush1.bf16.msra.mxu0 0
    %1791 = vmatprep.subr.bf16.mxu0 0
    %1792 = vmatpush1.bf16.msra.mxu0 0
    %1793 = vmatprep.subr.bf16.mxu0 0
    %1794 = vmatpush1.bf16.msra.mxu0 %v1776
    %1795 = vmatprep.subr.bf16.mxu0 0
    %1796 = vmatpush1.bf16.msra.mxu0 %v1775
    %1797 = vmatprep.subr.bf16.mxu0 0
    %1798 = vmatpush1.bf16.msra.mxu0 %v1774
    %1799 = vmatprep.subr.bf16.mxu0 0
    %1800 = vmatpush2.bf16.msra.mxu0 0
    %1801 = vmatprep.subr.bf16.mxu0 0
    %1802 = vmatpush2.bf16.msra.mxu0 0
    %1803 = vmatprep.subr.bf16.mxu0 0
    %1804 = vmatpush2.bf16.msra.mxu0 0
    %1805 = vmatprep.subr.bf16.mxu0 0
    %1806 = vmatpush2.bf16.msra.mxu0 0
    %1807 = vmatprep.subr.bf16.mxu0 0
    %1808 = vmatpush2.bf16.msra.mxu0 0
    %1809 = vmatprep.subr.bf16.mxu0 0
    %1810 = vmatpush2.bf16.msra.mxu0 0
    %1811 = vmatprep.subr.bf16.mxu0 0
    %1812 = vmatpush2.bf16.msra.mxu0 0
    %1813 = vmatprep.subr.bf16.mxu0 0
    %1814 = vmatpush2.bf16.msra.mxu0 0
    %1815 = vmatprep.mubr.bf16.mxu0 0
    %1816 = vmatmul.mubr.bf16.gmra.mxu0 %v1781
    %v1817 = vpop.f32.mrf.mxu0
    %v1818 = vadd.f32 %v1760, %v1817
    %v1819 = vpop.f32.mrf.mxu0
    %v1820 = vpop.f32.mrf.mxu0
    %v1821 = vadd.f32 %v1760, %v1820
    %v1822 = vpop.f32.mrf.mxu0
    %1823 = vdwg.mxu0
    %v1824 = vpack.c.bf16 %v1821, %v1818
    %v1825 = vld [vmem:[%s11] sm:$0xf]
    %v1826 = vld [vmem:[%s11 + $0x4] sm:$0xf]
    %v1827 = vld [vmem:[%s11 + $0x8] sm:$0xf]
    %v1828 = vld [vmem:[%s11 + $0xc] sm:$0xf]
    %v1829 = vld [vmem:[%s12] sm:$0x1]
    %v1831 = vlaneseq
    %v1832 = vshrl.u32 %v1831, 7
    %v1833 = vsub.s32 0, %v1832
    %v1834 = vrot.slane %v1829, %v1833
    %v1840 = vunpack.c.l.b16 %v1825
    %v1841 = vunpack.c.l.b16 %v1826
    %v1842 = vunpack.c.l.b16 %v1827
    %v1843 = vunpack.c.l.b16 %v1828
    %v1844 = vpack.c.b16 %v1841, %v1840
    %v1845 = vpack.c.b16 %v1843, %v1842
    %v1849 = vsel %vm1596, %v1824, 0
    %1851 = vmatprep.subr.bf16.mxu0 0
    %1852 = vmatpush1.bf16.msra.mxu0 0
    %1853 = vmatprep.subr.bf16.mxu0 0
    %1854 = vmatpush1.bf16.msra.mxu0 0
    %1855 = vmatprep.subr.bf16.mxu0 0
    %1856 = vmatpush1.bf16.msra.mxu0 0
    %1857 = vmatprep.subr.bf16.mxu0 0
    %1858 = vmatpush1.bf16.msra.mxu0 0
    %1859 = vmatprep.subr.bf16.mxu0 0
    %1860 = vmatpush1.bf16.msra.mxu0 0
    %1861 = vmatprep.subr.bf16.mxu0 0
    %1862 = vmatpush1.bf16.msra.mxu0 0
    %1863 = vmatprep.subr.bf16.mxu0 0
    %1864 = vmatpush1.bf16.msra.mxu0 %v1845
    %1865 = vmatprep.subr.bf16.mxu0 0
    %1866 = vmatpush1.bf16.msra.mxu0 %v1844
    %1867 = vmatprep.subr.bf16.mxu0 0
    %1868 = vmatpush2.bf16.msra.mxu0 0
    %1869 = vmatprep.subr.bf16.mxu0 0
    %1870 = vmatpush2.bf16.msra.mxu0 0
    %1871 = vmatprep.subr.bf16.mxu0 0
    %1872 = vmatpush2.bf16.msra.mxu0 0
    %1873 = vmatprep.subr.bf16.mxu0 0
    %1874 = vmatpush2.bf16.msra.mxu0 0
    %1875 = vmatprep.subr.bf16.mxu0 0
    %1876 = vmatpush2.bf16.msra.mxu0 0
    %1877 = vmatprep.subr.bf16.mxu0 0
    %1878 = vmatpush2.bf16.msra.mxu0 0
    %1879 = vmatprep.subr.bf16.mxu0 0
    %1880 = vmatpush2.bf16.msra.mxu0 0
    %1881 = vmatprep.subr.bf16.mxu0 0
    %1882 = vmatpush2.bf16.msra.mxu0 0
    %1883 = vmatprep.mubr.bf16.mxu0 0
    %1884 = vmatmul.mubr.bf16.gmra.mxu0 %v1849
    %v1885 = vpop.f32.mrf.mxu0
    %v1886 = vadd.f32 %v1834, %v1885
    %v1887 = vpop.f32.mrf.mxu0
    %v1888 = vpop.f32.mrf.mxu0
    %v1889 = vadd.f32 %v1834, %v1888
    %v1890 = vpop.f32.mrf.mxu0
    %1891 = vdwg.mxu0
    %v1892 = vpack.c.bf16 %v1889, %v1886
    %v1893 = vld [vmem:[%s13] sm:$0xf]
    %v1894 = vld [vmem:[%s13 + $0x4] sm:$0xf]
    %v1895 = vld [vmem:[%s13 + $0x8] sm:$0xf]
    %v1896 = vld [vmem:[%s13 + $0xc] sm:$0xf]
    %v1897 = vld [vmem:[%s14] sm:$0x1]
    %v1899 = vlaneseq
    %v1900 = vshrl.u32 %v1899, 7
    %v1901 = vsub.s32 0, %v1900
    %v1902 = vrot.slane %v1897, %v1901
    %v1908 = vunpack.c.l.b16 %v1893
    %v1909 = vunpack.c.l.b16 %v1894
    %v1910 = vunpack.c.l.b16 %v1895
    %v1911 = vunpack.c.l.b16 %v1896
    %v1912 = vpack.c.b16 %v1909, %v1908
    %v1913 = vpack.c.b16 %v1911, %v1910
    %v1917 = vsel %vm1596, %v1892, 0
    %1919 = vmatprep.subr.bf16.mxu0 0
    %1920 = vmatpush1.bf16.msra.mxu0 0
    %1921 = vmatprep.subr.bf16.mxu0 0
    %1922 = vmatpush1.bf16.msra.mxu0 0
    %1923 = vmatprep.subr.bf16.mxu0 0
    %1924 = vmatpush1.bf16.msra.mxu0 0
    %1925 = vmatprep.subr.bf16.mxu0 0
    %1926 = vmatpush1.bf16.msra.mxu0 0
    %1927 = vmatprep.subr.bf16.mxu0 0
    %1928 = vmatpush1.bf16.msra.mxu0 0
    %1929 = vmatprep.subr.bf16.mxu0 0
    %1930 = vmatpush1.bf16.msra.mxu0 0
    %1931 = vmatprep.subr.bf16.mxu0 0
    %1932 = vmatpush1.bf16.msra.mxu0 %v1913
    %1933 = vmatprep.subr.bf16.mxu0 0
    %1934 = vmatpush1.bf16.msra.mxu0 %v1912
    %1935 = vmatprep.subr.bf16.mxu0 0
    %1936 = vmatpush2.bf16.msra.mxu0 0
    %1937 = vmatprep.subr.bf16.mxu0 0
    %1938 = vmatpush2.bf16.msra.mxu0 0
    %1939 = vmatprep.subr.bf16.mxu0 0
    %1940 = vmatpush2.bf16.msra.mxu0 0
    %1941 = vmatprep.subr.bf16.mxu0 0
    %1942 = vmatpush2.bf16.msra.mxu0 0
    %1943 = vmatprep.subr.bf16.mxu0 0
    %1944 = vmatpush2.bf16.msra.mxu0 0
    %1945 = vmatprep.subr.bf16.mxu0 0
    %1946 = vmatpush2.bf16.msra.mxu0 0
    %1947 = vmatprep.subr.bf16.mxu0 0
    %1948 = vmatpush2.bf16.msra.mxu0 0
    %1949 = vmatprep.subr.bf16.mxu0 0
    %1950 = vmatpush2.bf16.msra.mxu0 0
    %1951 = vmatprep.mubr.bf16.mxu0 0
    %1952 = vmatmul.mubr.bf16.gmra.mxu0 %v1917
    %v1953 = vpop.f32.mrf.mxu0
    %v1954 = vadd.f32 %v1902, %v1953
    %v1955 = vpop.f32.mrf.mxu0
    %v1956 = vpop.f32.mrf.mxu0
    %v1957 = vadd.f32 %v1902, %v1956
    %v1958 = vpop.f32.mrf.mxu0
    %1959 = vdwg.mxu0
    %v1960 = vxor.u32 %v1954, 2147483648
    %v1961 = vxor.u32 %v1957, 2147483648
    %v1962 = vmul.f32 %v1960, 1.442695
    %v1963 = vpow.pop %v1962
    %v1964 = vmul.f32 %v1961, 1.442695
    %v1965 = vpow.pop %v1964
    %v1966 = vadd.f32 %v1963, 1.0
    %v1967 = vadd.f32 %v1965, 1.0
    %v1968 = vrcp.pop %v1966
    %v1969 = vmul.f32 1.0, %v1968
    %v1970 = vrcp.pop %v1967
    %v1971 = vmul.f32 1.0, %v1970
    %vm1972 = vcmask 64512
    %1973 = vst.msk [vmem:[%s16] sm:$0xff] %vm1972, %v1969
    %1974 = vst.msk [vmem:[%s16 + $0x8] sm:$0xff] %vm1972, %v1971
    // Predicated region
    $region66: #{tpu_custom_call.1} parent=1 // pred_check
      _
    $region67: #{tpu_custom_call.1} parent=1 // pred_check_branch
      %1976 = sbr.rel (0) target = $region69
    $region68: #{tpu_custom_call.1} parent=1 // pred_region
      %s1978 = ssub.s32 16, 16
      %1979 = vsyncadd [#allocation4], %s1978
      %s1981 = sshll.u32 [#allocation5], 4
      %s1982 = int_to_ptr.vmem [resolvable:$true] %s1981
      %1984 = dma.vmem_to_hbm [thread:$0]  %s1982, 16, %s15, [#allocation4]
    $region69: #{tpu_custom_call.1} parent=1 // pred_fallthru
      _
    // Predicated region
    $region70: #{tpu_custom_call.1} parent=1 // pred_check
      _
    $region71: #{tpu_custom_call.1} parent=1 // pred_check_branch
      %1986 = sbr.rel (0) target = $region73
    $region72: #{tpu_custom_call.1} parent=1 // pred_region
      _
    $region73: #{tpu_custom_call.1} parent=1 // pred_fallthru
      _
    // Predicated region
    $region74: #{tpu_custom_call.1} parent=1 // pred_check
      _
    $region75: #{tpu_custom_call.1} parent=1 // pred_check_branch
      %1988 = sbr.rel (0) target = $region77
    $region76: #{tpu_custom_call.1} parent=1 // pred_region
      %1989 = dma.done [#allocation4], 16
    $region77: #{tpu_custom_call.1} parent=1 // pred_fallthru
      _
    // Predicated region
    $region78: #{tpu_custom_call.1} parent=1 // pred_check
      _
    $region79: #{tpu_custom_call.1} parent=1 // pred_check_branch
      %1991 = sbr.rel (0) target = $region81
    $region80: #{tpu_custom_call.1} parent=1 // pred_region
      _
    $region81: #{tpu_custom_call.1} parent=1 // pred_fallthru
      _
    %1992 = vsyncpa [#allocation3], 1
    %1993 = vsyncpa [#allocation4], 1

</llo_original>
